<compile_context>
chip_gen: v6e
topology: v6e:2x2x1
jax: 0.10.0
libtpu: 0.0.40
codegen_flags: <defaults>
</compile_context>

<pallas_src>
import math

import jax
import jax.numpy as jnp
from jax.experimental import pallas as pl
from jax.experimental.pallas import tpu as pltpu

# ---- problem sizes (small, consistent with the module) ----------------------
B, S, D, H, DFF = 2, 8, 32, 4, 64
DK = D // H
BS = B * S
EPS = 1e-6
NEG_INF = -1e9


# ---- Pallas kernel: full decoder block, all batches in one invocation -------
def decoder_block_kernel(ln_ref, x_ref, enc_ref, tgt_mask_ref, src_mask_ref,
                         wqkv_s_ref, bqkv_s_ref, wkv_c_ref, bkv_c_ref,
                         wmix_ref, bmix_ref, w1_ref, b1_ref, w2_ref, b2_ref,
                         o_ref):
    x = x_ref[...]              # (BS, D)
    enc = enc_ref[...]          # (BS, D)
    tgt_m = tgt_mask_ref[...]   # (BS, BS) additive, block-diagonal over batch
    src_m = src_mask_ref[...]   # (BS, BS) additive, block-diagonal over batch

    def layernorm(v, alpha, bias):
        # Single-pass mean/var; unbiased (ddof=1); divide by (std + eps),
        # matching the PyTorch LayerNormalization module.
        s = jnp.sum(v, axis=-1, keepdims=True)
        ss = jnp.sum(v * v, axis=-1, keepdims=True)
        mean = s * (1.0 / D)
        var = (ss - s * mean) * (1.0 / (D - 1))
        inv = pl.reciprocal(jnp.sqrt(var) + EPS, approx=True)
        return alpha * (v - mean) * inv + bias

    def mh_attention(q, k, v, add_mask):
        # q/k/v: (BS, D) with head blocks along lanes; score scale is already
        # folded into the Q projection weights.  add_mask keeps batches apart.
        outs = []
        for h in range(H):  # static unrolled loop over heads
            qh = q[:, h * DK:(h + 1) * DK]
            kh = k[:, h * DK:(h + 1) * DK]
            vh = v[:, h * DK:(h + 1) * DK]
            # scores = qh @ kh^T without materializing the transpose.
            sc = jax.lax.dot_general(qh, kh, (((1,), (1,)), ((), ())),
                                     preferred_element_type=jnp.float32)
            sc = sc + add_mask
            sc = sc - jnp.max(sc, axis=-1, keepdims=True)
            p = jnp.exp(sc)
            p = p * pl.reciprocal(jnp.sum(p, axis=-1, keepdims=True),
                                  approx=True)
            outs.append(jnp.dot(p, vh, preferred_element_type=jnp.float32))
        return jnp.concatenate(outs, axis=-1)  # (BS, D)

    # residual 0: masked self-attention (dropout = identity)
    xn = layernorm(x, ln_ref[0], ln_ref[1])
    qkv = jnp.dot(xn, wqkv_s_ref[...],
                  preferred_element_type=jnp.float32) + bqkv_s_ref[...]
    attn = mh_attention(qkv[:, 0:D], qkv[:, D:2 * D], qkv[:, 2 * D:3 * D],
                        tgt_m)
    x = x + jnp.dot(attn, wmix_ref[0],
                    preferred_element_type=jnp.float32) + bmix_ref[0]

    # residual 1: cross-attention (Q from norm(x); K,V from raw encoder output)
    xn = layernorm(x, ln_ref[2], ln_ref[3])
    q = jnp.dot(xn, wmix_ref[1],
                preferred_element_type=jnp.float32) + bmix_ref[1]
    kv = jnp.dot(enc, wkv_c_ref[...],
                 preferred_element_type=jnp.float32) + bkv_c_ref[...]
    attn = mh_attention(q, kv[:, 0:D], kv[:, D:2 * D], src_m)
    x = x + jnp.dot(attn, wmix_ref[2],
                    preferred_element_type=jnp.float32) + bmix_ref[2]

    # residual 2: feed-forward (dropout = identity)
    xn = layernorm(x, ln_ref[4], ln_ref[5])
    h1 = jnp.maximum(
        jnp.dot(xn, w1_ref[...], preferred_element_type=jnp.float32)
        + b1_ref[...], 0.0)
    x = x + jnp.dot(h1, w2_ref[...],
                    preferred_element_type=jnp.float32) + b2_ref[...]

    o_ref[...] = x


# ---- wrapper: weight fusion / mask preprocessing + pallas_call ---------------
def _merged_additive_mask(mask):
    """(B, S, S) {0,1} mask -> (B*S, B*S) additive block-diagonal mask."""
    big = jnp.full((BS, BS), NEG_INF, jnp.float32)
    for b in range(B):
        blk = jnp.where(mask[b] == 0, jnp.float32(NEG_INF), jnp.float32(0.0))
        big = big.at[b * S:(b + 1) * S, b * S:(b + 1) * S].set(blk)
    return big


@jax.jit
def decoder_block(ln, x, enc, tgt_mask, src_mask, attn_w, attn_b, w1, b1, w2, b2):
    scale = 1.0 / math.sqrt(DK)
    x2d = x.reshape(BS, D)
    enc2d = enc.reshape(BS, D)
    tgt_add = _merged_additive_mask(tgt_mask)
    src_add = _merged_additive_mask(src_mask)

    # Self-attention: fused [Q*scale | K | V] -> single (D, 3D) matmul.
    wqkv_s = jnp.concatenate(
        [attn_w[0, 0] * scale, attn_w[0, 1], attn_w[0, 2]], axis=1)
    bqkv_s = jnp.concatenate(
        [attn_b[0, 0] * scale, attn_b[0, 1], attn_b[0, 2]])[None, :]
    # Cross-attention: fused [K | V] from encoder output -> single (D, 2D) matmul.
    wkv_c = jnp.concatenate([attn_w[1, 1], attn_w[1, 2]], axis=1)
    bkv_c = jnp.concatenate([attn_b[1, 1], attn_b[1, 2]])[None, :]
    # Remaining (D, D) projections stacked: [W_o_self, W_q_cross*scale, W_o_cross].
    wmix = jnp.stack([attn_w[0, 3], attn_w[1, 0] * scale, attn_w[1, 3]])
    bmix = jnp.stack([attn_b[0, 3], attn_b[1, 0] * scale,
                      attn_b[1, 3]])[:, None, :]

    vmem = pltpu.MemorySpace.VMEM
    out2d = pl.pallas_call(
        decoder_block_kernel,
        out_shape=jax.ShapeDtypeStruct((BS, D), jnp.float32),
        in_specs=[
            pl.BlockSpec(memory_space=pltpu.MemorySpace.SMEM),  # ln scalars (6,)
            pl.BlockSpec(memory_space=vmem),  # x (BS, D)
            pl.BlockSpec(memory_space=vmem),  # encoder output (BS, D)
            pl.BlockSpec(memory_space=vmem),  # tgt additive mask (BS, BS)
            pl.BlockSpec(memory_space=vmem),  # src additive mask (BS, BS)
            pl.BlockSpec(memory_space=vmem),  # fused self QKV weight (D, 3D)
            pl.BlockSpec(memory_space=vmem),  # fused self QKV bias (1, 3D)
            pl.BlockSpec(memory_space=vmem),  # fused cross KV weight (D, 2D)
            pl.BlockSpec(memory_space=vmem),  # fused cross KV bias (1, 2D)
            pl.BlockSpec(memory_space=vmem),  # stacked (3, D, D) projections
            pl.BlockSpec(memory_space=vmem),  # stacked (3, 1, D) biases
            pl.BlockSpec(memory_space=vmem),  # ffn w1 (D, DFF)
            pl.BlockSpec(memory_space=vmem),  # ffn b1 (1, DFF)
            pl.BlockSpec(memory_space=vmem),  # ffn w2 (DFF, D)
            pl.BlockSpec(memory_space=vmem),  # ffn b2 (1, D)
        ],
        out_specs=pl.BlockSpec(memory_space=vmem),
    )(ln, x2d, enc2d, tgt_add, src_add, wqkv_s, bqkv_s, wkv_c, bkv_c,
      wmix, bmix, w1, b1, w2, b2)
    return out2d.reshape(B, S, D)


# ---- pure-JAX reference (original unfused math, exact divides) ---------------
def _layernorm_ref(x, alpha, bias):
    mean = jnp.mean(x, axis=-1, keepdims=True)
    var = jnp.sum((x - mean) ** 2, axis=-1, keepdims=True) / (x.shape[-1] - 1)
    std = jnp.sqrt(var)
    return alpha * (x - mean) / (std + EPS) + bias


def _mha_ref(xq, xkv, mask, w, b):
    q = jnp.dot(xq, w[0]) + b[0][None, :]
    k = jnp.dot(xkv, w[1]) + b[1][None, :]
    v = jnp.dot(xkv, w[2]) + b[2][None, :]
    scale = 1.0 / jnp.sqrt(jnp.float32(DK))
    heads = []
    for hh in range(H):
        qh = q[:, hh * DK:(hh + 1) * DK]
        kh = k[:, hh * DK:(hh + 1) * DK]
        vh = v[:, hh * DK:(hh + 1) * DK]
        scores = jnp.dot(qh, kh.T) * scale
        scores = jnp.where(mask == 0, jnp.float32(NEG_INF), scores)
        p = jax.nn.softmax(scores, axis=-1)
        heads.append(jnp.dot(p, vh))
    concat = jnp.concatenate(heads, axis=-1)
    return jnp.dot(concat, w[3]) + b[3][None, :]


def _decoder_block_single(x, enc, tgt_mask, src_mask, ln, attn_w, attn_b,
                          w1, b1, w2, b2):
    xn = _layernorm_ref(x, ln[0], ln[1])
    x = x + _mha_ref(xn, xn, tgt_mask, attn_w[0], attn_b[0])
    xn = _layernorm_ref(x, ln[2], ln[3])
    x = x + _mha_ref(xn, enc, src_mask, attn_w[1], attn_b[1])
    xn = _layernorm_ref(x, ln[4], ln[5])
    h1 = jnp.maximum(jnp.dot(xn, w1) + b1, 0.0)
    return x + jnp.dot(h1, w2) + b2


def decoder_block_ref(ln, x, enc, tgt_mask, src_mask, attn_w, attn_b,
                      w1, b1, w2, b2):
    return jax.vmap(_decoder_block_single,
                    in_axes=(0, 0, 0, 0) + (None,) * 7)(
        x, enc, tgt_mask, src_mask, ln, attn_w, attn_b, w1, b1, w2, b2)


if __name__ == "__main__":
    key = jax.random.PRNGKey(0)
    ks = jax.random.split(key, 10)

    # activations
    x = jax.random.normal(ks[0], (B, S, D), jnp.float32)
    enc = jax.random.normal(ks[1], (B, S, D), jnp.float32)
    # tgt_mask: causal; src_mask: all-ones
    tgt_mask = jnp.broadcast_to(jnp.tril(jnp.ones((S, S), jnp.float32)),
                                (B, S, S))
    src_mask = jnp.ones((B, S, S), jnp.float32)

    # parameters (deterministic in-script init)
    attn_w = 0.05 * jax.random.normal(ks[2], (2, 4, D, D), jnp.float32)  # [self,cross]x[q,k,v,o]
    attn_b = 0.05 * jax.random.normal(ks[3], (2, 4, D), jnp.float32)
    w1 = 0.05 * jax.random.normal(ks[4], (D, DFF), jnp.float32)
    b1 = 0.05 * jax.random.normal(ks[5], (1, DFF), jnp.float32)
    w2 = 0.05 * jax.random.normal(ks[6], (DFF, D), jnp.float32)
    b2 = 0.05 * jax.random.normal(ks[7], (1, D), jnp.float32)
    # LayerNormalization params per __init__: alpha=1, bias=0 (3 norms, interleaved)
    ln = jnp.array([1.0, 0.0, 1.0, 0.0, 1.0, 0.0], jnp.float32)

    out = decoder_block(ln, x, enc, tgt_mask, src_mask,
                        attn_w, attn_b, w1, b1, w2, b2)
    out = jax.block_until_ready(out)

    ref = decoder_block_ref(ln, x, enc, tgt_mask, src_mask,
                            attn_w, attn_b, w1, b1, w2, b2)
    assert out.shape == (B, S, D)
    # Tolerance 5e-3 because the kernel uses approximate EUP reciprocals for
    # the softmax denominator and the LayerNorm divide.
    assert jnp.allclose(out, ref, atol=5e-3, rtol=5e-3), "mismatch vs reference"
    print("KERNEL_OK")
</pallas_src>

<mosaic_0001>
module attributes {stable_mosaic.version = 11 : i64} {
  func.func @decoder_block_kernel(%arg0: memref<6xf32, #tpu.memory_space<smem>>, %arg1: memref<16x32xf32, #tpu.memory_space<vmem>>, %arg2: memref<16x32xf32, #tpu.memory_space<vmem>>, %arg3: memref<16x16xf32, #tpu.memory_space<vmem>>, %arg4: memref<16x16xf32, #tpu.memory_space<vmem>>, %arg5: memref<32x96xf32, #tpu.memory_space<vmem>>, %arg6: memref<1x96xf32, #tpu.memory_space<vmem>>, %arg7: memref<32x64xf32, #tpu.memory_space<vmem>>, %arg8: memref<1x64xf32, #tpu.memory_space<vmem>>, %arg9: memref<3x32x32xf32, #tpu.memory_space<vmem>>, %arg10: memref<3x1x32xf32, #tpu.memory_space<vmem>>, %arg11: memref<32x64xf32, #tpu.memory_space<vmem>>, %arg12: memref<1x64xf32, #tpu.memory_space<vmem>>, %arg13: memref<64x32xf32, #tpu.memory_space<vmem>>, %arg14: memref<1x32xf32, #tpu.memory_space<vmem>>, %arg15: memref<16x32xf32, #tpu.memory_space<vmem>>) attributes {dimension_semantics = [], scalar_prefetch = 0 : i64, scratch_operands = 0 : i64, tpu.core_type = #tpu.core_type<tc>} {
    %c0 = arith.constant 0 : index
    %c0_0 = arith.constant 0 : index
    %0 = vector.load %arg1[%c0, %c0_0] : memref<16x32xf32, #tpu.memory_space<vmem>>, vector<16x32xf32>
    %c0_1 = arith.constant 0 : index
    %c0_2 = arith.constant 0 : index
    %1 = vector.load %arg2[%c0_1, %c0_2] : memref<16x32xf32, #tpu.memory_space<vmem>>, vector<16x32xf32>
    %c0_3 = arith.constant 0 : index
    %c0_4 = arith.constant 0 : index
    %2 = vector.load %arg3[%c0_3, %c0_4] : memref<16x16xf32, #tpu.memory_space<vmem>>, vector<16x16xf32>
    %c0_5 = arith.constant 0 : index
    %c0_6 = arith.constant 0 : index
    %3 = vector.load %arg4[%c0_5, %c0_6] : memref<16x16xf32, #tpu.memory_space<vmem>>, vector<16x16xf32>
    %c0_7 = arith.constant 0 : index
    %4 = memref.load %arg0[%c0_7] : memref<6xf32, #tpu.memory_space<smem>>
    %c1 = arith.constant 1 : index
    %5 = memref.load %arg0[%c1] : memref<6xf32, #tpu.memory_space<smem>>
    %cst = arith.constant dense<0.000000e+00> : vector<16xf32>
    %6 = vector.multi_reduction <add>, %0, %cst [1] : vector<16x32xf32> to vector<16xf32>
    %7 = vector.shape_cast %6 : vector<16xf32> to vector<16x1xf32>
    %8 = arith.mulf %0, %0 : vector<16x32xf32>
    %cst_8 = arith.constant dense<0.000000e+00> : vector<16xf32>
    %9 = vector.multi_reduction <add>, %8, %cst_8 [1] : vector<16x32xf32> to vector<16xf32>
    %10 = vector.shape_cast %9 : vector<16xf32> to vector<16x1xf32>
    %cst_9 = arith.constant 3.125000e-02 : f32
    %11 = vector.broadcast %cst_9 : f32 to vector<16x1xf32>
    %12 = arith.mulf %7, %11 : vector<16x1xf32>
    %13 = arith.mulf %7, %12 : vector<16x1xf32>
    %14 = arith.subf %10, %13 : vector<16x1xf32>
    %cst_10 = arith.constant 0.0322580636 : f32
    %15 = vector.broadcast %cst_10 : f32 to vector<16x1xf32>
    %16 = arith.mulf %14, %15 : vector<16x1xf32>
    %17 = math.sqrt %16 : vector<16x1xf32>
    %cst_11 = arith.constant 9.99999997E-7 : f32
    %18 = vector.broadcast %cst_11 : f32 to vector<16x1xf32>
    %19 = arith.addf %17, %18 : vector<16x1xf32>
    %20 = tpu.reciprocal %19 {approx = true} : vector<16x1xf32> -> vector<16x1xf32>
    %21 = vector.broadcast %12 : vector<16x1xf32> to vector<16x32xf32>
    %22 = arith.subf %0, %21 : vector<16x32xf32>
    %23 = vector.broadcast %4 : f32 to vector<16x32xf32>
    %24 = arith.mulf %23, %22 : vector<16x32xf32>
    %25 = vector.broadcast %20 : vector<16x1xf32> to vector<16x32xf32>
    %26 = arith.mulf %24, %25 : vector<16x32xf32>
    %27 = vector.broadcast %5 : f32 to vector<16x32xf32>
    %28 = arith.addf %26, %27 : vector<16x32xf32>
    %c0_12 = arith.constant 0 : index
    %c0_13 = arith.constant 0 : index
    %29 = vector.load %arg5[%c0_12, %c0_13] : memref<32x96xf32, #tpu.memory_space<vmem>>, vector<32x96xf32>
    %cst_14 = arith.constant dense<0.000000e+00> : vector<16x96xf32>
    %30 = tpu.matmul %28, %29, %cst_14 {dimension_numbers = #tpu.dot_dimension_numbers<[1], [0], [0], [1], [0, 0, 1, 1], [], []>} : vector<16x32xf32>, vector<32x96xf32>, vector<16x96xf32> -> vector<16x96xf32>
    %c0_15 = arith.constant 0 : index
    %c0_16 = arith.constant 0 : index
    %31 = vector.load %arg6[%c0_15, %c0_16] : memref<1x96xf32, #tpu.memory_space<vmem>>, vector<1x96xf32>
    %32 = vector.broadcast %31 : vector<1x96xf32> to vector<16x96xf32>
    %33 = arith.addf %30, %32 : vector<16x96xf32>
    %34 = vector.extract_strided_slice %33 {offsets = [0, 0], sizes = [16, 32], strides = [1, 1]} : vector<16x96xf32> to vector<16x32xf32>
    %35 = vector.extract_strided_slice %33 {offsets = [0, 32], sizes = [16, 32], strides = [1, 1]} : vector<16x96xf32> to vector<16x32xf32>
    %36 = vector.extract_strided_slice %33 {offsets = [0, 64], sizes = [16, 32], strides = [1, 1]} : vector<16x96xf32> to vector<16x32xf32>
    %37 = vector.extract_strided_slice %34 {offsets = [0, 0], sizes = [16, 8], strides = [1, 1]} : vector<16x32xf32> to vector<16x8xf32>
    %38 = vector.extract_strided_slice %35 {offsets = [0, 0], sizes = [16, 8], strides = [1, 1]} : vector<16x32xf32> to vector<16x8xf32>
    %39 = vector.extract_strided_slice %36 {offsets = [0, 0], sizes = [16, 8], strides = [1, 1]} : vector<16x32xf32> to vector<16x8xf32>
    %cst_17 = arith.constant dense<0.000000e+00> : vector<16x16xf32>
    %40 = tpu.matmul %37, %38, %cst_17 {dimension_numbers = #tpu.dot_dimension_numbers<[1], [1], [0], [0], [0, 0, 1, 0], [], []>} : vector<16x8xf32>, vector<16x8xf32>, vector<16x16xf32> -> vector<16x16xf32>
    %41 = arith.addf %40, %2 : vector<16x16xf32>
    %cst_18 = arith.constant dense<0xFF800000> : vector<16xf32>
    %42 = vector.multi_reduction <maximumf>, %41, %cst_18 [1] : vector<16x16xf32> to vector<16xf32>
    %43 = vector.shape_cast %42 : vector<16xf32> to vector<16x1xf32>
    %44 = vector.broadcast %43 : vector<16x1xf32> to vector<16x16xf32>
    %45 = arith.subf %41, %44 : vector<16x16xf32>
    %46 = math.exp %45 : vector<16x16xf32>
    %cst_19 = arith.constant dense<0.000000e+00> : vector<16xf32>
    %47 = vector.multi_reduction <add>, %46, %cst_19 [1] : vector<16x16xf32> to vector<16xf32>
    %48 = vector.shape_cast %47 : vector<16xf32> to vector<16x1xf32>
    %49 = tpu.reciprocal %48 {approx = true} : vector<16x1xf32> -> vector<16x1xf32>
    %50 = vector.broadcast %49 : vector<16x1xf32> to vector<16x16xf32>
    %51 = arith.mulf %46, %50 : vector<16x16xf32>
    %cst_20 = arith.constant dense<0.000000e+00> : vector<16x8xf32>
    %52 = tpu.matmul %51, %39, %cst_20 {dimension_numbers = #tpu.dot_dimension_numbers<[1], [0], [0], [1], [0, 0, 1, 1], [], []>} : vector<16x16xf32>, vector<16x8xf32>, vector<16x8xf32> -> vector<16x8xf32>
    %53 = vector.extract_strided_slice %34 {offsets = [0, 8], sizes = [16, 8], strides = [1, 1]} : vector<16x32xf32> to vector<16x8xf32>
    %54 = vector.extract_strided_slice %35 {offsets = [0, 8], sizes = [16, 8], strides = [1, 1]} : vector<16x32xf32> to vector<16x8xf32>
    %55 = vector.extract_strided_slice %36 {offsets = [0, 8], sizes = [16, 8], strides = [1, 1]} : vector<16x32xf32> to vector<16x8xf32>
    %cst_21 = arith.constant dense<0.000000e+00> : vector<16x16xf32>
    %56 = tpu.matmul %53, %54, %cst_21 {dimension_numbers = #tpu.dot_dimension_numbers<[1], [1], [0], [0], [0, 0, 1, 0], [], []>} : vector<16x8xf32>, vector<16x8xf32>, vector<16x16xf32> -> vector<16x16xf32>
    %57 = arith.addf %56, %2 : vector<16x16xf32>
    %cst_22 = arith.constant dense<0xFF800000> : vector<16xf32>
    %58 = vector.multi_reduction <maximumf>, %57, %cst_22 [1] : vector<16x16xf32> to vector<16xf32>
    %59 = vector.shape_cast %58 : vector<16xf32> to vector<16x1xf32>
    %60 = vector.broadcast %59 : vector<16x1xf32> to vector<16x16xf32>
    %61 = arith.subf %57, %60 : vector<16x16xf32>
    %62 = math.exp %61 : vector<16x16xf32>
    %cst_23 = arith.constant dense<0.000000e+00> : vector<16xf32>
    %63 = vector.multi_reduction <add>, %62, %cst_23 [1] : vector<16x16xf32> to vector<16xf32>
    %64 = vector.shape_cast %63 : vector<16xf32> to vector<16x1xf32>
    %65 = tpu.reciprocal %64 {approx = true} : vector<16x1xf32> -> vector<16x1xf32>
    %66 = vector.broadcast %65 : vector<16x1xf32> to vector<16x16xf32>
    %67 = arith.mulf %62, %66 : vector<16x16xf32>
    %cst_24 = arith.constant dense<0.000000e+00> : vector<16x8xf32>
    %68 = tpu.matmul %67, %55, %cst_24 {dimension_numbers = #tpu.dot_dimension_numbers<[1], [0], [0], [1], [0, 0, 1, 1], [], []>} : vector<16x16xf32>, vector<16x8xf32>, vector<16x8xf32> -> vector<16x8xf32>
    %69 = vector.extract_strided_slice %34 {offsets = [0, 16], sizes = [16, 8], strides = [1, 1]} : vector<16x32xf32> to vector<16x8xf32>
    %70 = vector.extract_strided_slice %35 {offsets = [0, 16], sizes = [16, 8], strides = [1, 1]} : vector<16x32xf32> to vector<16x8xf32>
    %71 = vector.extract_strided_slice %36 {offsets = [0, 16], sizes = [16, 8], strides = [1, 1]} : vector<16x32xf32> to vector<16x8xf32>
    %cst_25 = arith.constant dense<0.000000e+00> : vector<16x16xf32>
    %72 = tpu.matmul %69, %70, %cst_25 {dimension_numbers = #tpu.dot_dimension_numbers<[1], [1], [0], [0], [0, 0, 1, 0], [], []>} : vector<16x8xf32>, vector<16x8xf32>, vector<16x16xf32> -> vector<16x16xf32>
    %73 = arith.addf %72, %2 : vector<16x16xf32>
    %cst_26 = arith.constant dense<0xFF800000> : vector<16xf32>
    %74 = vector.multi_reduction <maximumf>, %73, %cst_26 [1] : vector<16x16xf32> to vector<16xf32>
    %75 = vector.shape_cast %74 : vector<16xf32> to vector<16x1xf32>
    %76 = vector.broadcast %75 : vector<16x1xf32> to vector<16x16xf32>
    %77 = arith.subf %73, %76 : vector<16x16xf32>
    %78 = math.exp %77 : vector<16x16xf32>
    %cst_27 = arith.constant dense<0.000000e+00> : vector<16xf32>
    %79 = vector.multi_reduction <add>, %78, %cst_27 [1] : vector<16x16xf32> to vector<16xf32>
    %80 = vector.shape_cast %79 : vector<16xf32> to vector<16x1xf32>
    %81 = tpu.reciprocal %80 {approx = true} : vector<16x1xf32> -> vector<16x1xf32>
    %82 = vector.broadcast %81 : vector<16x1xf32> to vector<16x16xf32>
    %83 = arith.mulf %78, %82 : vector<16x16xf32>
    %cst_28 = arith.constant dense<0.000000e+00> : vector<16x8xf32>
    %84 = tpu.matmul %83, %71, %cst_28 {dimension_numbers = #tpu.dot_dimension_numbers<[1], [0], [0], [1], [0, 0, 1, 1], [], []>} : vector<16x16xf32>, vector<16x8xf32>, vector<16x8xf32> -> vector<16x8xf32>
    %85 = vector.extract_strided_slice %34 {offsets = [0, 24], sizes = [16, 8], strides = [1, 1]} : vector<16x32xf32> to vector<16x8xf32>
    %86 = vector.extract_strided_slice %35 {offsets = [0, 24], sizes = [16, 8], strides = [1, 1]} : vector<16x32xf32> to vector<16x8xf32>
    %87 = vector.extract_strided_slice %36 {offsets = [0, 24], sizes = [16, 8], strides = [1, 1]} : vector<16x32xf32> to vector<16x8xf32>
    %cst_29 = arith.constant dense<0.000000e+00> : vector<16x16xf32>
    %88 = tpu.matmul %85, %86, %cst_29 {dimension_numbers = #tpu.dot_dimension_numbers<[1], [1], [0], [0], [0, 0, 1, 0], [], []>} : vector<16x8xf32>, vector<16x8xf32>, vector<16x16xf32> -> vector<16x16xf32>
    %89 = arith.addf %88, %2 : vector<16x16xf32>
    %cst_30 = arith.constant dense<0xFF800000> : vector<16xf32>
    %90 = vector.multi_reduction <maximumf>, %89, %cst_30 [1] : vector<16x16xf32> to vector<16xf32>
    %91 = vector.shape_cast %90 : vector<16xf32> to vector<16x1xf32>
    %92 = vector.broadcast %91 : vector<16x1xf32> to vector<16x16xf32>
    %93 = arith.subf %89, %92 : vector<16x16xf32>
    %94 = math.exp %93 : vector<16x16xf32>
    %cst_31 = arith.constant dense<0.000000e+00> : vector<16xf32>
    %95 = vector.multi_reduction <add>, %94, %cst_31 [1] : vector<16x16xf32> to vector<16xf32>
    %96 = vector.shape_cast %95 : vector<16xf32> to vector<16x1xf32>
    %97 = tpu.reciprocal %96 {approx = true} : vector<16x1xf32> -> vector<16x1xf32>
    %98 = vector.broadcast %97 : vector<16x1xf32> to vector<16x16xf32>
    %99 = arith.mulf %94, %98 : vector<16x16xf32>
    %cst_32 = arith.constant dense<0.000000e+00> : vector<16x8xf32>
    %100 = tpu.matmul %99, %87, %cst_32 {dimension_numbers = #tpu.dot_dimension_numbers<[1], [0], [0], [1], [0, 0, 1, 1], [], []>} : vector<16x16xf32>, vector<16x8xf32>, vector<16x8xf32> -> vector<16x8xf32>
    %101 = tpu.concatenate %52, %68, %84, %100 in 1 : vector<16x8xf32>, vector<16x8xf32>, vector<16x8xf32>, vector<16x8xf32> -> vector<16x32xf32>
    %c0_33 = arith.constant 0 : index
    %c0_34 = arith.constant 0 : index
    %c0_35 = arith.constant 0 : index
    %102 = vector.load %arg9[%c0_33, %c0_34, %c0_35] : memref<3x32x32xf32, #tpu.memory_space<vmem>>, vector<1x32x32xf32>
    %103 = vector.shape_cast %102 : vector<1x32x32xf32> to vector<32x32xf32>
    %cst_36 = arith.constant dense<0.000000e+00> : vector<16x32xf32>
    %104 = tpu.matmul %101, %103, %cst_36 {dimension_numbers = #tpu.dot_dimension_numbers<[1], [0], [0], [1], [0, 0, 1, 1], [], []>} : vector<16x32xf32>, vector<32x32xf32>, vector<16x32xf32> -> vector<16x32xf32>
    %105 = arith.addf %0, %104 : vector<16x32xf32>
    %c0_37 = arith.constant 0 : index
    %c0_38 = arith.constant 0 : index
    %c0_39 = arith.constant 0 : index
    %106 = vector.load %arg10[%c0_37, %c0_38, %c0_39] : memref<3x1x32xf32, #tpu.memory_space<vmem>>, vector<1x1x32xf32>
    %107 = vector.shape_cast %106 : vector<1x1x32xf32> to vector<1x32xf32>
    %108 = vector.broadcast %107 : vector<1x32xf32> to vector<16x32xf32>
    %109 = arith.addf %105, %108 : vector<16x32xf32>
    %c2 = arith.constant 2 : index
    %110 = memref.load %arg0[%c2] : memref<6xf32, #tpu.memory_space<smem>>
    %c3 = arith.constant 3 : index
    %111 = memref.load %arg0[%c3] : memref<6xf32, #tpu.memory_space<smem>>
    %cst_40 = arith.constant dense<0.000000e+00> : vector<16xf32>
    %112 = vector.multi_reduction <add>, %109, %cst_40 [1] : vector<16x32xf32> to vector<16xf32>
    %113 = vector.shape_cast %112 : vector<16xf32> to vector<16x1xf32>
    %114 = arith.mulf %109, %109 : vector<16x32xf32>
    %cst_41 = arith.constant dense<0.000000e+00> : vector<16xf32>
    %115 = vector.multi_reduction <add>, %114, %cst_41 [1] : vector<16x32xf32> to vector<16xf32>
    %116 = vector.shape_cast %115 : vector<16xf32> to vector<16x1xf32>
    %cst_42 = arith.constant 3.125000e-02 : f32
    %117 = vector.broadcast %cst_42 : f32 to vector<16x1xf32>
    %118 = arith.mulf %113, %117 : vector<16x1xf32>
    %119 = arith.mulf %113, %118 : vector<16x1xf32>
    %120 = arith.subf %116, %119 : vector<16x1xf32>
    %cst_43 = arith.constant 0.0322580636 : f32
    %121 = vector.broadcast %cst_43 : f32 to vector<16x1xf32>
    %122 = arith.mulf %120, %121 : vector<16x1xf32>
    %123 = math.sqrt %122 : vector<16x1xf32>
    %cst_44 = arith.constant 9.99999997E-7 : f32
    %124 = vector.broadcast %cst_44 : f32 to vector<16x1xf32>
    %125 = arith.addf %123, %124 : vector<16x1xf32>
    %126 = tpu.reciprocal %125 {approx = true} : vector<16x1xf32> -> vector<16x1xf32>
    %127 = vector.broadcast %118 : vector<16x1xf32> to vector<16x32xf32>
    %128 = arith.subf %109, %127 : vector<16x32xf32>
    %129 = vector.broadcast %110 : f32 to vector<16x32xf32>
    %130 = arith.mulf %129, %128 : vector<16x32xf32>
    %131 = vector.broadcast %126 : vector<16x1xf32> to vector<16x32xf32>
    %132 = arith.mulf %130, %131 : vector<16x32xf32>
    %133 = vector.broadcast %111 : f32 to vector<16x32xf32>
    %134 = arith.addf %132, %133 : vector<16x32xf32>
    %c1_45 = arith.constant 1 : index
    %c0_46 = arith.constant 0 : index
    %c0_47 = arith.constant 0 : index
    %135 = vector.load %arg9[%c1_45, %c0_46, %c0_47] : memref<3x32x32xf32, #tpu.memory_space<vmem>>, vector<1x32x32xf32>
    %136 = vector.shape_cast %135 : vector<1x32x32xf32> to vector<32x32xf32>
    %cst_48 = arith.constant dense<0.000000e+00> : vector<16x32xf32>
    %137 = tpu.matmul %134, %136, %cst_48 {dimension_numbers = #tpu.dot_dimension_numbers<[1], [0], [0], [1], [0, 0, 1, 1], [], []>} : vector<16x32xf32>, vector<32x32xf32>, vector<16x32xf32> -> vector<16x32xf32>
    %c1_49 = arith.constant 1 : index
    %c0_50 = arith.constant 0 : index
    %c0_51 = arith.constant 0 : index
    %138 = vector.load %arg10[%c1_49, %c0_50, %c0_51] : memref<3x1x32xf32, #tpu.memory_space<vmem>>, vector<1x1x32xf32>
    %139 = vector.shape_cast %138 : vector<1x1x32xf32> to vector<1x32xf32>
    %140 = vector.broadcast %139 : vector<1x32xf32> to vector<16x32xf32>
    %141 = arith.addf %137, %140 : vector<16x32xf32>
    %c0_52 = arith.constant 0 : index
    %c0_53 = arith.constant 0 : index
    %142 = vector.load %arg7[%c0_52, %c0_53] : memref<32x64xf32, #tpu.memory_space<vmem>>, vector<32x64xf32>
    %cst_54 = arith.constant dense<0.000000e+00> : vector<16x64xf32>
    %143 = tpu.matmul %1, %142, %cst_54 {dimension_numbers = #tpu.dot_dimension_numbers<[1], [0], [0], [1], [0, 0, 1, 1], [], []>} : vector<16x32xf32>, vector<32x64xf32>, vector<16x64xf32> -> vector<16x64xf32>
    %c0_55 = arith.constant 0 : index
    %c0_56 = arith.constant 0 : index
    %144 = vector.load %arg8[%c0_55, %c0_56] : memref<1x64xf32, #tpu.memory_space<vmem>>, vector<1x64xf32>
    %145 = vector.broadcast %144 : vector<1x64xf32> to vector<16x64xf32>
    %146 = arith.addf %143, %145 : vector<16x64xf32>
    %147 = vector.extract_strided_slice %146 {offsets = [0, 0], sizes = [16, 32], strides = [1, 1]} : vector<16x64xf32> to vector<16x32xf32>
    %148 = vector.extract_strided_slice %146 {offsets = [0, 32], sizes = [16, 32], strides = [1, 1]} : vector<16x64xf32> to vector<16x32xf32>
    %149 = vector.extract_strided_slice %141 {offsets = [0, 0], sizes = [16, 8], strides = [1, 1]} : vector<16x32xf32> to vector<16x8xf32>
    %150 = vector.extract_strided_slice %147 {offsets = [0, 0], sizes = [16, 8], strides = [1, 1]} : vector<16x32xf32> to vector<16x8xf32>
    %151 = vector.extract_strided_slice %148 {offsets = [0, 0], sizes = [16, 8], strides = [1, 1]} : vector<16x32xf32> to vector<16x8xf32>
    %cst_57 = arith.constant dense<0.000000e+00> : vector<16x16xf32>
    %152 = tpu.matmul %149, %150, %cst_57 {dimension_numbers = #tpu.dot_dimension_numbers<[1], [1], [0], [0], [0, 0, 1, 0], [], []>} : vector<16x8xf32>, vector<16x8xf32>, vector<16x16xf32> -> vector<16x16xf32>
    %153 = arith.addf %152, %3 : vector<16x16xf32>
    %cst_58 = arith.constant dense<0xFF800000> : vector<16xf32>
    %154 = vector.multi_reduction <maximumf>, %153, %cst_58 [1] : vector<16x16xf32> to vector<16xf32>
    %155 = vector.shape_cast %154 : vector<16xf32> to vector<16x1xf32>
    %156 = vector.broadcast %155 : vector<16x1xf32> to vector<16x16xf32>
    %157 = arith.subf %153, %156 : vector<16x16xf32>
    %158 = math.exp %157 : vector<16x16xf32>
    %cst_59 = arith.constant dense<0.000000e+00> : vector<16xf32>
    %159 = vector.multi_reduction <add>, %158, %cst_59 [1] : vector<16x16xf32> to vector<16xf32>
    %160 = vector.shape_cast %159 : vector<16xf32> to vector<16x1xf32>
    %161 = tpu.reciprocal %160 {approx = true} : vector<16x1xf32> -> vector<16x1xf32>
    %162 = vector.broadcast %161 : vector<16x1xf32> to vector<16x16xf32>
    %163 = arith.mulf %158, %162 : vector<16x16xf32>
    %cst_60 = arith.constant dense<0.000000e+00> : vector<16x8xf32>
    %164 = tpu.matmul %163, %151, %cst_60 {dimension_numbers = #tpu.dot_dimension_numbers<[1], [0], [0], [1], [0, 0, 1, 1], [], []>} : vector<16x16xf32>, vector<16x8xf32>, vector<16x8xf32> -> vector<16x8xf32>
    %165 = vector.extract_strided_slice %141 {offsets = [0, 8], sizes = [16, 8], strides = [1, 1]} : vector<16x32xf32> to vector<16x8xf32>
    %166 = vector.extract_strided_slice %147 {offsets = [0, 8], sizes = [16, 8], strides = [1, 1]} : vector<16x32xf32> to vector<16x8xf32>
    %167 = vector.extract_strided_slice %148 {offsets = [0, 8], sizes = [16, 8], strides = [1, 1]} : vector<16x32xf32> to vector<16x8xf32>
    %cst_61 = arith.constant dense<0.000000e+00> : vector<16x16xf32>
    %168 = tpu.matmul %165, %166, %cst_61 {dimension_numbers = #tpu.dot_dimension_numbers<[1], [1], [0], [0], [0, 0, 1, 0], [], []>} : vector<16x8xf32>, vector<16x8xf32>, vector<16x16xf32> -> vector<16x16xf32>
    %169 = arith.addf %168, %3 : vector<16x16xf32>
    %cst_62 = arith.constant dense<0xFF800000> : vector<16xf32>
    %170 = vector.multi_reduction <maximumf>, %169, %cst_62 [1] : vector<16x16xf32> to vector<16xf32>
    %171 = vector.shape_cast %170 : vector<16xf32> to vector<16x1xf32>
    %172 = vector.broadcast %171 : vector<16x1xf32> to vector<16x16xf32>
    %173 = arith.subf %169, %172 : vector<16x16xf32>
    %174 = math.exp %173 : vector<16x16xf32>
    %cst_63 = arith.constant dense<0.000000e+00> : vector<16xf32>
    %175 = vector.multi_reduction <add>, %174, %cst_63 [1] : vector<16x16xf32> to vector<16xf32>
    %176 = vector.shape_cast %175 : vector<16xf32> to vector<16x1xf32>
    %177 = tpu.reciprocal %176 {approx = true} : vector<16x1xf32> -> vector<16x1xf32>
    %178 = vector.broadcast %177 : vector<16x1xf32> to vector<16x16xf32>
    %179 = arith.mulf %174, %178 : vector<16x16xf32>
    %cst_64 = arith.constant dense<0.000000e+00> : vector<16x8xf32>
    %180 = tpu.matmul %179, %167, %cst_64 {dimension_numbers = #tpu.dot_dimension_numbers<[1], [0], [0], [1], [0, 0, 1, 1], [], []>} : vector<16x16xf32>, vector<16x8xf32>, vector<16x8xf32> -> vector<16x8xf32>
    %181 = vector.extract_strided_slice %141 {offsets = [0, 16], sizes = [16, 8], strides = [1, 1]} : vector<16x32xf32> to vector<16x8xf32>
    %182 = vector.extract_strided_slice %147 {offsets = [0, 16], sizes = [16, 8], strides = [1, 1]} : vector<16x32xf32> to vector<16x8xf32>
    %183 = vector.extract_strided_slice %148 {offsets = [0, 16], sizes = [16, 8], strides = [1, 1]} : vector<16x32xf32> to vector<16x8xf32>
    %cst_65 = arith.constant dense<0.000000e+00> : vector<16x16xf32>
    %184 = tpu.matmul %181, %182, %cst_65 {dimension_numbers = #tpu.dot_dimension_numbers<[1], [1], [0], [0], [0, 0, 1, 0], [], []>} : vector<16x8xf32>, vector<16x8xf32>, vector<16x16xf32> -> vector<16x16xf32>
    %185 = arith.addf %184, %3 : vector<16x16xf32>
    %cst_66 = arith.constant dense<0xFF800000> : vector<16xf32>
    %186 = vector.multi_reduction <maximumf>, %185, %cst_66 [1] : vector<16x16xf32> to vector<16xf32>
    %187 = vector.shape_cast %186 : vector<16xf32> to vector<16x1xf32>
    %188 = vector.broadcast %187 : vector<16x1xf32> to vector<16x16xf32>
    %189 = arith.subf %185, %188 : vector<16x16xf32>
    %190 = math.exp %189 : vector<16x16xf32>
    %cst_67 = arith.constant dense<0.000000e+00> : vector<16xf32>
    %191 = vector.multi_reduction <add>, %190, %cst_67 [1] : vector<16x16xf32> to vector<16xf32>
    %192 = vector.shape_cast %191 : vector<16xf32> to vector<16x1xf32>
    %193 = tpu.reciprocal %192 {approx = true} : vector<16x1xf32> -> vector<16x1xf32>
    %194 = vector.broadcast %193 : vector<16x1xf32> to vector<16x16xf32>
    %195 = arith.mulf %190, %194 : vector<16x16xf32>
    %cst_68 = arith.constant dense<0.000000e+00> : vector<16x8xf32>
    %196 = tpu.matmul %195, %183, %cst_68 {dimension_numbers = #tpu.dot_dimension_numbers<[1], [0], [0], [1], [0, 0, 1, 1], [], []>} : vector<16x16xf32>, vector<16x8xf32>, vector<16x8xf32> -> vector<16x8xf32>
    %197 = vector.extract_strided_slice %141 {offsets = [0, 24], sizes = [16, 8], strides = [1, 1]} : vector<16x32xf32> to vector<16x8xf32>
    %198 = vector.extract_strided_slice %147 {offsets = [0, 24], sizes = [16, 8], strides = [1, 1]} : vector<16x32xf32> to vector<16x8xf32>
    %199 = vector.extract_strided_slice %148 {offsets = [0, 24], sizes = [16, 8], strides = [1, 1]} : vector<16x32xf32> to vector<16x8xf32>
    %cst_69 = arith.constant dense<0.000000e+00> : vector<16x16xf32>
    %200 = tpu.matmul %197, %198, %cst_69 {dimension_numbers = #tpu.dot_dimension_numbers<[1], [1], [0], [0], [0, 0, 1, 0], [], []>} : vector<16x8xf32>, vector<16x8xf32>, vector<16x16xf32> -> vector<16x16xf32>
    %201 = arith.addf %200, %3 : vector<16x16xf32>
    %cst_70 = arith.constant dense<0xFF800000> : vector<16xf32>
    %202 = vector.multi_reduction <maximumf>, %201, %cst_70 [1] : vector<16x16xf32> to vector<16xf32>
    %203 = vector.shape_cast %202 : vector<16xf32> to vector<16x1xf32>
    %204 = vector.broadcast %203 : vector<16x1xf32> to vector<16x16xf32>
    %205 = arith.subf %201, %204 : vector<16x16xf32>
    %206 = math.exp %205 : vector<16x16xf32>
    %cst_71 = arith.constant dense<0.000000e+00> : vector<16xf32>
    %207 = vector.multi_reduction <add>, %206, %cst_71 [1] : vector<16x16xf32> to vector<16xf32>
    %208 = vector.shape_cast %207 : vector<16xf32> to vector<16x1xf32>
    %209 = tpu.reciprocal %208 {approx = true} : vector<16x1xf32> -> vector<16x1xf32>
    %210 = vector.broadcast %209 : vector<16x1xf32> to vector<16x16xf32>
    %211 = arith.mulf %206, %210 : vector<16x16xf32>
    %cst_72 = arith.constant dense<0.000000e+00> : vector<16x8xf32>
    %212 = tpu.matmul %211, %199, %cst_72 {dimension_numbers = #tpu.dot_dimension_numbers<[1], [0], [0], [1], [0, 0, 1, 1], [], []>} : vector<16x16xf32>, vector<16x8xf32>, vector<16x8xf32> -> vector<16x8xf32>
    %213 = tpu.concatenate %164, %180, %196, %212 in 1 : vector<16x8xf32>, vector<16x8xf32>, vector<16x8xf32>, vector<16x8xf32> -> vector<16x32xf32>
    %c2_73 = arith.constant 2 : index
    %c0_74 = arith.constant 0 : index
    %c0_75 = arith.constant 0 : index
    %214 = vector.load %arg9[%c2_73, %c0_74, %c0_75] : memref<3x32x32xf32, #tpu.memory_space<vmem>>, vector<1x32x32xf32>
    %215 = vector.shape_cast %214 : vector<1x32x32xf32> to vector<32x32xf32>
    %cst_76 = arith.constant dense<0.000000e+00> : vector<16x32xf32>
    %216 = tpu.matmul %213, %215, %cst_76 {dimension_numbers = #tpu.dot_dimension_numbers<[1], [0], [0], [1], [0, 0, 1, 1], [], []>} : vector<16x32xf32>, vector<32x32xf32>, vector<16x32xf32> -> vector<16x32xf32>
    %217 = arith.addf %109, %216 : vector<16x32xf32>
    %c2_77 = arith.constant 2 : index
    %c0_78 = arith.constant 0 : index
    %c0_79 = arith.constant 0 : index
    %218 = vector.load %arg10[%c2_77, %c0_78, %c0_79] : memref<3x1x32xf32, #tpu.memory_space<vmem>>, vector<1x1x32xf32>
    %219 = vector.shape_cast %218 : vector<1x1x32xf32> to vector<1x32xf32>
    %220 = vector.broadcast %219 : vector<1x32xf32> to vector<16x32xf32>
    %221 = arith.addf %217, %220 : vector<16x32xf32>
    %c4 = arith.constant 4 : index
    %222 = memref.load %arg0[%c4] : memref<6xf32, #tpu.memory_space<smem>>
    %c5 = arith.constant 5 : index
    %223 = memref.load %arg0[%c5] : memref<6xf32, #tpu.memory_space<smem>>
    %cst_80 = arith.constant dense<0.000000e+00> : vector<16xf32>
    %224 = vector.multi_reduction <add>, %221, %cst_80 [1] : vector<16x32xf32> to vector<16xf32>
    %225 = vector.shape_cast %224 : vector<16xf32> to vector<16x1xf32>
    %226 = arith.mulf %221, %221 : vector<16x32xf32>
    %cst_81 = arith.constant dense<0.000000e+00> : vector<16xf32>
    %227 = vector.multi_reduction <add>, %226, %cst_81 [1] : vector<16x32xf32> to vector<16xf32>
    %228 = vector.shape_cast %227 : vector<16xf32> to vector<16x1xf32>
    %cst_82 = arith.constant 3.125000e-02 : f32
    %229 = vector.broadcast %cst_82 : f32 to vector<16x1xf32>
    %230 = arith.mulf %225, %229 : vector<16x1xf32>
    %231 = arith.mulf %225, %230 : vector<16x1xf32>
    %232 = arith.subf %228, %231 : vector<16x1xf32>
    %cst_83 = arith.constant 0.0322580636 : f32
    %233 = vector.broadcast %cst_83 : f32 to vector<16x1xf32>
    %234 = arith.mulf %232, %233 : vector<16x1xf32>
    %235 = math.sqrt %234 : vector<16x1xf32>
    %cst_84 = arith.constant 9.99999997E-7 : f32
    %236 = vector.broadcast %cst_84 : f32 to vector<16x1xf32>
    %237 = arith.addf %235, %236 : vector<16x1xf32>
    %238 = tpu.reciprocal %237 {approx = true} : vector<16x1xf32> -> vector<16x1xf32>
    %239 = vector.broadcast %230 : vector<16x1xf32> to vector<16x32xf32>
    %240 = arith.subf %221, %239 : vector<16x32xf32>
    %241 = vector.broadcast %222 : f32 to vector<16x32xf32>
    %242 = arith.mulf %241, %240 : vector<16x32xf32>
    %243 = vector.broadcast %238 : vector<16x1xf32> to vector<16x32xf32>
    %244 = arith.mulf %242, %243 : vector<16x32xf32>
    %245 = vector.broadcast %223 : f32 to vector<16x32xf32>
    %246 = arith.addf %244, %245 : vector<16x32xf32>
    %c0_85 = arith.constant 0 : index
    %c0_86 = arith.constant 0 : index
    %247 = vector.load %arg11[%c0_85, %c0_86] : memref<32x64xf32, #tpu.memory_space<vmem>>, vector<32x64xf32>
    %cst_87 = arith.constant dense<0.000000e+00> : vector<16x64xf32>
    %248 = tpu.matmul %246, %247, %cst_87 {dimension_numbers = #tpu.dot_dimension_numbers<[1], [0], [0], [1], [0, 0, 1, 1], [], []>} : vector<16x32xf32>, vector<32x64xf32>, vector<16x64xf32> -> vector<16x64xf32>
    %c0_88 = arith.constant 0 : index
    %c0_89 = arith.constant 0 : index
    %249 = vector.load %arg12[%c0_88, %c0_89] : memref<1x64xf32, #tpu.memory_space<vmem>>, vector<1x64xf32>
    %250 = vector.broadcast %249 : vector<1x64xf32> to vector<16x64xf32>
    %251 = arith.addf %248, %250 : vector<16x64xf32>
    %cst_90 = arith.constant 0.000000e+00 : f32
    %252 = vector.broadcast %cst_90 : f32 to vector<16x64xf32>
    %253 = arith.maximumf %251, %252 : vector<16x64xf32>
    %c0_91 = arith.constant 0 : index
    %c0_92 = arith.constant 0 : index
    %254 = vector.load %arg13[%c0_91, %c0_92] : memref<64x32xf32, #tpu.memory_space<vmem>>, vector<64x32xf32>
    %cst_93 = arith.constant dense<0.000000e+00> : vector<16x32xf32>
    %255 = tpu.matmul %253, %254, %cst_93 {dimension_numbers = #tpu.dot_dimension_numbers<[1], [0], [0], [1], [0, 0, 1, 1], [], []>} : vector<16x64xf32>, vector<64x32xf32>, vector<16x32xf32> -> vector<16x32xf32>
    %256 = arith.addf %221, %255 : vector<16x32xf32>
    %c0_94 = arith.constant 0 : index
    %c0_95 = arith.constant 0 : index
    %257 = vector.load %arg14[%c0_94, %c0_95] : memref<1x32xf32, #tpu.memory_space<vmem>>, vector<1x32xf32>
    %258 = vector.broadcast %257 : vector<1x32xf32> to vector<16x32xf32>
    %259 = arith.addf %256, %258 : vector<16x32xf32>
    %c0_96 = arith.constant 0 : index
    %c0_97 = arith.constant 0 : index
    %260 = vector.load %arg15[%c0_96, %c0_97] : memref<16x32xf32, #tpu.memory_space<vmem>>, vector<16x32xf32>
    tpu.vector_store %arg15[%c0_96, %c0_97], %259 {strides = array<i32>} : memref<16x32xf32, #tpu.memory_space<vmem>>, vector<16x32xf32>,
    return
  }
}

</mosaic_0001>

<llo_original>
// kernel: decoder_block.1
$region0: #{decoder_block.1}
  #allocation0 [shape = 'u32[]', space=smem, size = 0x4, offset = 0x4, fixed_abs, tag = 'smem constant byte address 0x4 - core index']
  #allocation1 [shape = 'u32[144,128]{1,0:T(1,128)}', space=vmem, size = 0x12000, scoped, tag = 'internal scratch']
  %s0 = inlined_call_operand.vmem [shape: f32[6], index: 0, kind: input, shape index: {}]
  %s1 = inlined_call_operand.vmem [shape: f32[16,32], index: 1, kind: input, shape index: {}]
  %s2 = inlined_call_operand.vmem [shape: f32[16,32], index: 2, kind: input, shape index: {}]
  %s3 = inlined_call_operand.vmem [shape: f32[16,16], index: 3, kind: input, shape index: {}]
  %s4 = inlined_call_operand.vmem [shape: f32[16,16], index: 4, kind: input, shape index: {}]
  %s5 = inlined_call_operand.vmem [shape: f32[32,96], index: 5, kind: input, shape index: {}]
  %s6 = inlined_call_operand.vmem [shape: f32[1,96], index: 6, kind: input, shape index: {}]
  %s7 = inlined_call_operand.vmem [shape: f32[32,64], index: 7, kind: input, shape index: {}]
  %s8 = inlined_call_operand.vmem [shape: f32[1,64], index: 8, kind: input, shape index: {}]
  %s9 = inlined_call_operand.vmem [shape: f32[3,32,32], index: 9, kind: input, shape index: {}]
  %s10 = inlined_call_operand.vmem [shape: f32[3,1,32], index: 10, kind: input, shape index: {}]
  %s11 = inlined_call_operand.vmem [shape: f32[32,64], index: 11, kind: input, shape index: {}]
  %s12 = inlined_call_operand.vmem [shape: f32[1,64], index: 12, kind: input, shape index: {}]
  %s13 = inlined_call_operand.vmem [shape: f32[64,32], index: 13, kind: input, shape index: {}]
  %s14 = inlined_call_operand.vmem [shape: f32[1,32], index: 14, kind: input, shape index: {}]
  %s15 = inlined_call_operand.hbm [shape: f32[16,32], index: 15, kind: output, shape index: {}]
  %s16 = sld [smem:[#allocation0]]
  $region74: #{decoder_block.1} parent=0
    _
  %s18 = ssub.s32 1, %s16
  %s19 = scalar_select 0, %s18, %s16
  $region1: #{decoder_block.1} parent=0
    #allocation2 [shape = 'u8[512]{0}', space=smem, size = 0x200, scoped, tag = 'input window, operand 0, single buffered']
    #allocation3 [shape = 's32[1]{0}', space=sflag, size = 0x4, scoped, tag = 'scoped memory for decoder_block.1']
    #allocation4 [shape = 's32[1]{0}', space=sflag, size = 0x4, scoped, tag = 'scoped memory for decoder_block.1']
    #allocation5 [shape = 'u8[8192]{0}', space=vmem, size = 0x2000, scoped, tag = 'output window, operand 0, single buffered']
    %20 = vsyncpa [#allocation4], 0
    %21 = vsyncpa [#allocation3], 0
    // Predicated region
    $region2: #{decoder_block.1} parent=1 // pred_check
      _
    $region3: #{decoder_block.1} parent=1 // pred_check_branch
      %23 = sbr.rel (0) target = $region5
    $region4: #{decoder_block.1} parent=1 // pred_region
      %s25 = ssub.s32 16, 16
      %26 = vsyncadd [#allocation4], %s25
      %s28 = sshll.u32 %s0, 4
      %s29 = int_to_ptr.vmem [resolvable:$true] %s28
      %31 = dma.vmem_to_smem %s29, 16, [#allocation2], [#allocation4]
    $region5: #{decoder_block.1} parent=1 // pred_fallthru
      _
    // Predicated region
    $region6: #{decoder_block.1} parent=1 // pred_check
      _
    $region7: #{decoder_block.1} parent=1 // pred_check_branch
      %33 = sbr.rel (0) target = $region9
    $region8: #{decoder_block.1} parent=1 // pred_region
      _
    $region9: #{decoder_block.1} parent=1 // pred_fallthru
      _
    // Predicated region
    $region10: #{decoder_block.1} parent=1 // pred_check
      _
    $region11: #{decoder_block.1} parent=1 // pred_check_branch
      %35 = sbr.rel (0) target = $region13
    $region12: #{decoder_block.1} parent=1 // pred_region
      _
    $region13: #{decoder_block.1} parent=1 // pred_fallthru
      _
    // Predicated region
    $region14: #{decoder_block.1} parent=1 // pred_check
      _
    $region15: #{decoder_block.1} parent=1 // pred_check_branch
      %37 = sbr.rel (0) target = $region17
    $region16: #{decoder_block.1} parent=1 // pred_region
      _
    $region17: #{decoder_block.1} parent=1 // pred_fallthru
      _
    // Predicated region
    $region18: #{decoder_block.1} parent=1 // pred_check
      _
    $region19: #{decoder_block.1} parent=1 // pred_check_branch
      %39 = sbr.rel (0) target = $region21
    $region20: #{decoder_block.1} parent=1 // pred_region
      _
    $region21: #{decoder_block.1} parent=1 // pred_fallthru
      _
    // Predicated region
    $region22: #{decoder_block.1} parent=1 // pred_check
      _
    $region23: #{decoder_block.1} parent=1 // pred_check_branch
      %41 = sbr.rel (0) target = $region25
    $region24: #{decoder_block.1} parent=1 // pred_region
      _
    $region25: #{decoder_block.1} parent=1 // pred_fallthru
      _
    // Predicated region
    $region26: #{decoder_block.1} parent=1 // pred_check
      _
    $region27: #{decoder_block.1} parent=1 // pred_check_branch
      %43 = sbr.rel (0) target = $region29
    $region28: #{decoder_block.1} parent=1 // pred_region
      _
    $region29: #{decoder_block.1} parent=1 // pred_fallthru
      _
    // Predicated region
    $region30: #{decoder_block.1} parent=1 // pred_check
      _
    $region31: #{decoder_block.1} parent=1 // pred_check_branch
      %45 = sbr.rel (0) target = $region33
    $region32: #{decoder_block.1} parent=1 // pred_region
      _
    $region33: #{decoder_block.1} parent=1 // pred_fallthru
      _
    // Predicated region
    $region34: #{decoder_block.1} parent=1 // pred_check
      _
    $region35: #{decoder_block.1} parent=1 // pred_check_branch
      %47 = sbr.rel (0) target = $region37
    $region36: #{decoder_block.1} parent=1 // pred_region
      _
    $region37: #{decoder_block.1} parent=1 // pred_fallthru
      _
    // Predicated region
    $region38: #{decoder_block.1} parent=1 // pred_check
      _
    $region39: #{decoder_block.1} parent=1 // pred_check_branch
      %49 = sbr.rel (0) target = $region41
    $region40: #{decoder_block.1} parent=1 // pred_region
      _
    $region41: #{decoder_block.1} parent=1 // pred_fallthru
      _
    // Predicated region
    $region42: #{decoder_block.1} parent=1 // pred_check
      _
    $region43: #{decoder_block.1} parent=1 // pred_check_branch
      %51 = sbr.rel (0) target = $region45
    $region44: #{decoder_block.1} parent=1 // pred_region
      _
    $region45: #{decoder_block.1} parent=1 // pred_fallthru
      _
    // Predicated region
    $region46: #{decoder_block.1} parent=1 // pred_check
      _
    $region47: #{decoder_block.1} parent=1 // pred_check_branch
      %53 = sbr.rel (0) target = $region49
    $region48: #{decoder_block.1} parent=1 // pred_region
      _
    $region49: #{decoder_block.1} parent=1 // pred_fallthru
      _
    // Predicated region
    $region50: #{decoder_block.1} parent=1 // pred_check
      _
    $region51: #{decoder_block.1} parent=1 // pred_check_branch
      %55 = sbr.rel (0) target = $region53
    $region52: #{decoder_block.1} parent=1 // pred_region
      _
    $region53: #{decoder_block.1} parent=1 // pred_fallthru
      _
    // Predicated region
    $region54: #{decoder_block.1} parent=1 // pred_check
      _
    $region55: #{decoder_block.1} parent=1 // pred_check_branch
      %57 = sbr.rel (0) target = $region57
    $region56: #{decoder_block.1} parent=1 // pred_region
      _
    $region57: #{decoder_block.1} parent=1 // pred_fallthru
      _
    // Predicated region
    $region58: #{decoder_block.1} parent=1 // pred_check
      _
    $region59: #{decoder_block.1} parent=1 // pred_check_branch
      %59 = sbr.rel (0) target = $region61
    $region60: #{decoder_block.1} parent=1 // pred_region
      _
    $region61: #{decoder_block.1} parent=1 // pred_fallthru
      _
    // Predicated region
    $region62: #{decoder_block.1} parent=1 // pred_check
      _
    $region63: #{decoder_block.1} parent=1 // pred_check_branch
      %61 = sbr.rel (0) target = $region65
    $region64: #{decoder_block.1} parent=1 // pred_region
      %62 = dma.done [#allocation4], 16
    $region65: #{decoder_block.1} parent=1 // pred_fallthru
      _
    %63 = sfence
    %v64 = vld [vmem:[%s1] sm:$0xff]
    %v65 = vld [vmem:[%s1 + $0x8] sm:$0xff]
    %v66 = vld [vmem:[%s2] sm:$0xff]
    %v67 = vld [vmem:[%s2 + $0x8] sm:$0xff]
    %v68 = vld [vmem:[%s3] sm:$0xff]
    %v69 = vld [vmem:[%s3 + $0x8] sm:$0xff]
    %v70 = vld [vmem:[%s4] sm:$0xff]
    %v71 = vld [vmem:[%s4 + $0x8] sm:$0xff]
    %s72 = sld [smem:[#allocation2]]
    %s73 = sld [smem:[#allocation2 + $0x1]]
    %vm74 = vcmask 261120
    %v75 = vsel %vm74, %v64, 0.0
    %76 = vadd.xlane.f32.xlu0 %v75
    %v77 = vpop.xlane.xlu0 %76
    %v78 = vsel %vm74, %v65, 0.0
    %79 = vadd.xlane.f32.xlu0 %v78
    %v80 = vpop.xlane.xlu0 %79
    %v81 = vmul.f32 %v64, %v64
    %v82 = vmul.f32 %v65, %v65
    %v83 = vsel %vm74, %v81, 0.0
    %84 = vadd.xlane.f32.xlu0 %v83
    %v85 = vpop.xlane.xlu0 %84
    %v86 = vsel %vm74, %v82, 0.0
    %87 = vadd.xlane.f32.xlu0 %v86
    %v88 = vpop.xlane.xlu0 %87
    %v89 = vmul.f32 %v77, 0.03125
    %v90 = vmul.f32 %v80, 0.03125
    %v91 = vmul.f32 %v77, %v89
    %v92 = vmul.f32 %v80, %v90
    %v93 = vsub.f32 %v85, %v91
    %v94 = vsub.f32 %v88, %v92
    %v95 = vmul.f32 %v93, 0.032258064
    %v96 = vmul.f32 %v94, 0.032258064
    %v97 = vrsqrt.pop %v95
    %v98 = vmul.f32 %v95, %v97
    %vm99 = vcmp.eq.f32.partialorder %v95, inf
    %v100 = vsel %vm99, %v95, %v98
    %vm101 = vcmp.eq.f32.partialorder %v95, 0.0
    %v102 = vand.u32 %v95, 2147483648
    %v103 = vsel %vm101, %v102, %v100
    %v104 = vrsqrt.pop %v96
    %v105 = vmul.f32 %v96, %v104
    %vm106 = vcmp.eq.f32.partialorder %v96, inf
    %v107 = vsel %vm106, %v96, %v105
    %vm108 = vcmp.eq.f32.partialorder %v96, 0.0
    %v109 = vand.u32 %v96, 2147483648
    %v110 = vsel %vm108, %v109, %v107
    %v111 = vadd.f32 %v103, 1e-06
    %v112 = vadd.f32 %v110, 1e-06
    %v113 = vrcp.pop %v111
    %v114 = vrcp.pop %v112
    %v115 = vsub.f32 %v64, %v89
    %v116 = vsub.f32 %v65, %v90
    %v117 = vstv %s72
    %v118 = vmul.f32 %v117, %v115
    %v119 = vmul.f32 %v117, %v116
    %v120 = vmul.f32 %v118, %v113
    %v121 = vmul.f32 %v119, %v114
    %v122 = vstv %s73
    %v123 = vadd.f32 %v120, %v122
    %v124 = vadd.f32 %v121, %v122
    %v125 = vld [vmem:[%s5] sm:$0xff]
    %v126 = vld [vmem:[%s5 + $0x8] sm:$0xff]
    %v127 = vld [vmem:[%s5 + $0x10] sm:$0xff]
    %v128 = vld [vmem:[%s5 + $0x18] sm:$0xff]
    %v129 = vld [vmem:[%s6] sm:$0x1]
    %v131 = vlaneseq
    %v132 = vshrl.u32 %v131, 7
    %v133 = vsub.s32 0, %v132
    %v134 = vrot.slane %v129, %v133
    %v137 = vsel %vm74, %v123, 0
    %v140 = vsel %vm74, %v124, 0
    %142 = vmatprep.subr.mxu0 0.0
    %143 = vmatpush1.msra.mxu0 0.0
    %144 = vmatprep.subr.mxu0 0.0
    %145 = vmatpush1.msra.mxu0 0.0
    %146 = vmatprep.subr.mxu0 0.0
    %147 = vmatpush1.msra.mxu0 0.0
    %148 = vmatprep.subr.mxu0 0.0
    %149 = vmatpush1.msra.mxu0 0.0
    %150 = vmatprep.subr.mxu0 0.0
    %151 = vmatpush1.msra.mxu0 0.0
    %152 = vmatprep.subr.mxu0 0.0
    %153 = vmatpush1.msra.mxu0 0.0
    %154 = vmatprep.subr.mxu0 0.0
    %155 = vmatpush1.msra.mxu0 0.0
    %156 = vmatprep.subr.mxu0 0.0
    %157 = vmatpush1.msra.mxu0 0.0
    %158 = vmatprep.subr.mxu0 0.0
    %159 = vmatpush1.msra.mxu0 0.0
    %160 = vmatprep.subr.mxu0 0.0
    %161 = vmatpush1.msra.mxu0 0.0
    %162 = vmatprep.subr.mxu0 0.0
    %163 = vmatpush1.msra.mxu0 0.0
    %164 = vmatprep.subr.mxu0 0.0
    %165 = vmatpush1.msra.mxu0 0.0
    %166 = vmatprep.subr.mxu0 0.0
    %167 = vmatpush1.msra.mxu0 %v128
    %168 = vmatprep.subr.mxu0 0.0
    %169 = vmatpush1.msra.mxu0 %v127
    %170 = vmatprep.subr.mxu0 0.0
    %171 = vmatpush1.msra.mxu0 %v126
    %172 = vmatprep.subr.mxu0 0.0
    %173 = vmatpush1.msra.mxu0 %v125
    %174 = vmatprep.subr.mxu0 0.0
    %175 = vmatpush2.msra.mxu0 0.0
    %176 = vmatprep.subr.mxu0 0.0
    %177 = vmatpush2.msra.mxu0 0.0
    %178 = vmatprep.subr.mxu0 0.0
    %179 = vmatpush2.msra.mxu0 0.0
    %180 = vmatprep.subr.mxu0 0.0
    %181 = vmatpush2.msra.mxu0 0.0
    %182 = vmatprep.subr.mxu0 0.0
    %183 = vmatpush2.msra.mxu0 0.0
    %184 = vmatprep.subr.mxu0 0.0
    %185 = vmatpush2.msra.mxu0 0.0
    %186 = vmatprep.subr.mxu0 0.0
    %187 = vmatpush2.msra.mxu0 0.0
    %188 = vmatprep.subr.mxu0 0.0
    %189 = vmatpush2.msra.mxu0 0.0
    %190 = vmatprep.subr.mxu0 0.0
    %191 = vmatpush2.msra.mxu0 0.0
    %192 = vmatprep.subr.mxu0 0.0
    %193 = vmatpush2.msra.mxu0 0.0
    %194 = vmatprep.subr.mxu0 0.0
    %195 = vmatpush2.msra.mxu0 0.0
    %196 = vmatprep.subr.mxu0 0.0
    %197 = vmatpush2.msra.mxu0 0.0
    %198 = vmatprep.subr.mxu0 0.0
    %199 = vmatpush2.msra.mxu0 0.0
    %200 = vmatprep.subr.mxu0 0.0
    %201 = vmatpush2.msra.mxu0 0.0
    %202 = vmatprep.subr.mxu0 0.0
    %203 = vmatpush2.msra.mxu0 0.0
    %204 = vmatprep.subr.mxu0 0.0
    %205 = vmatpush2.msra.mxu0 0.0
    %206 = vmatprep.mubr.f32.mxu0 0.0
    %207 = vmatmul.mubr.f32.gmra.mxu0 %v137
    %v208 = vpop.f32.mrf.mxu0
    %v209 = vadd.f32 %v134, %v208
    %v210 = vpop.f32.mrf.mxu0
    %211 = vmatprep.mubr.f32.mxu0 0.0
    %212 = vmatmul.mubr.f32.gmra.mxu0 %v140
    %v213 = vpop.f32.mrf.mxu0
    %v214 = vadd.f32 %v134, %v213
    %v215 = vpop.f32.mrf.mxu0
    %216 = vdwg.mxu0
    %219 = vrot.lane.b32.xlu0 %v209, 96
    %v220 = vpop.permute.xlu0 %219
    %221 = vrot.lane.b32.xlu0 %v214, 96
    %v222 = vpop.permute.xlu0 %221
    %vm223 = vcmask 64512
    %v224 = vsel %vm223, %v209, 0
    %v226 = vsel %vm223, %v214, 0
    %v228 = vsel %vm223, %v220, 0
    %v230 = vsel %vm223, %v222, 0
    %232 = vmatprep.subr.mxu0 0.0
    %233 = vmatpush1.xpose.msra.mxu0 0.0
    %234 = vmatprep.subr.mxu0 0.0
    %235 = vmatpush1.xpose.msra.mxu0 0.0
    %236 = vmatprep.subr.mxu0 0.0
    %237 = vmatpush1.xpose.msra.mxu0 0.0
    %238 = vmatprep.subr.mxu0 0.0
    %239 = vmatpush1.xpose.msra.mxu0 0.0
    %240 = vmatprep.subr.mxu0 0.0
    %241 = vmatpush1.xpose.msra.mxu0 0.0
    %242 = vmatprep.subr.mxu0 0.0
    %243 = vmatpush1.xpose.msra.mxu0 0.0
    %244 = vmatprep.subr.mxu0 0.0
    %245 = vmatpush1.xpose.msra.mxu0 0.0
    %246 = vmatprep.subr.mxu0 0.0
    %247 = vmatpush1.xpose.msra.mxu0 0.0
    %248 = vmatprep.subr.mxu0 0.0
    %249 = vmatpush1.xpose.msra.mxu0 0.0
    %250 = vmatprep.subr.mxu0 0.0
    %251 = vmatpush1.xpose.msra.mxu0 0.0
    %252 = vmatprep.subr.mxu0 0.0
    %253 = vmatpush1.xpose.msra.mxu0 0.0
    %254 = vmatprep.subr.mxu0 0.0
    %255 = vmatpush1.xpose.msra.mxu0 0.0
    %256 = vmatprep.subr.mxu0 0.0
    %257 = vmatpush1.xpose.msra.mxu0 0.0
    %258 = vmatprep.subr.mxu0 0.0
    %259 = vmatpush1.xpose.msra.mxu0 0.0
    %260 = vmatprep.subr.mxu0 0.0
    %261 = vmatpush1.xpose.msra.mxu0 %v230
    %262 = vmatprep.subr.mxu0 0.0
    %263 = vmatpush1.xpose.msra.mxu0 %v228
    %264 = vmatprep.subr.mxu0 0.0
    %265 = vmatpush2.xpose.msra.mxu0 0.0
    %266 = vmatprep.subr.mxu0 0.0
    %267 = vmatpush2.xpose.msra.mxu0 0.0
    %268 = vmatprep.subr.mxu0 0.0
    %269 = vmatpush2.xpose.msra.mxu0 0.0
    %270 = vmatprep.subr.mxu0 0.0
    %271 = vmatpush2.xpose.msra.mxu0 0.0
    %272 = vmatprep.subr.mxu0 0.0
    %273 = vmatpush2.xpose.msra.mxu0 0.0
    %274 = vmatprep.subr.mxu0 0.0
    %275 = vmatpush2.xpose.msra.mxu0 0.0
    %276 = vmatprep.subr.mxu0 0.0
    %277 = vmatpush2.xpose.msra.mxu0 0.0
    %278 = vmatprep.subr.mxu0 0.0
    %279 = vmatpush2.xpose.msra.mxu0 0.0
    %280 = vmatprep.subr.mxu0 0.0
    %281 = vmatpush2.xpose.msra.mxu0 0.0
    %282 = vmatprep.subr.mxu0 0.0
    %283 = vmatpush2.xpose.msra.mxu0 0.0
    %284 = vmatprep.subr.mxu0 0.0
    %285 = vmatpush2.xpose.msra.mxu0 0.0
    %286 = vmatprep.subr.mxu0 0.0
    %287 = vmatpush2.xpose.msra.mxu0 0.0
    %288 = vmatprep.subr.mxu0 0.0
    %289 = vmatpush2.xpose.msra.mxu0 0.0
    %290 = vmatprep.subr.mxu0 0.0
    %291 = vmatpush2.xpose.msra.mxu0 0.0
    %292 = vmatprep.subr.mxu0 0.0
    %293 = vmatpush2.xpose.msra.mxu0 0.0
    %294 = vmatprep.subr.mxu0 0.0
    %295 = vmatpush2.xpose.msra.mxu0 0.0
    %296 = vmatprep.mubr.f32.mxu0 0.0
    %297 = vmatmul.mubr.f32.gmra.mxu0 %v224
    %v298 = vpop.f32.mrf.mxu0
    %v299 = vadd.f32 %v68, %v298
    %v300 = vpop.f32.mrf.mxu0
    %301 = vmatprep.mubr.f32.mxu0 0.0
    %302 = vmatmul.mubr.f32.gmra.mxu0 %v226
    %v303 = vpop.f32.mrf.mxu0
    %v304 = vadd.f32 %v69, %v303
    %v305 = vpop.f32.mrf.mxu0
    %306 = vdwg.mxu0
    %vm307 = vcmask 130048
    %v308 = vsel %vm307, %v299, -inf
    %309 = vmax.xlane.f32.xlu0 %v308
    %v310 = vpop.xlane.xlu0 %309
    %v311 = vsel %vm307, %v304, -inf
    %312 = vmax.xlane.f32.xlu0 %v311
    %v313 = vpop.xlane.xlu0 %312
    %v314 = vsub.f32 %v299, %v310
    %v315 = vsub.f32 %v304, %v313
    %v316 = vmul.f32 %v314, 1.442695
    %v317 = vpow.pop %v316
    %v318 = vmul.f32 %v315, 1.442695
    %v319 = vpow.pop %v318
    %v320 = vsel %vm307, %v317, 0.0
    %321 = vadd.xlane.f32.xlu0 %v320
    %v322 = vpop.xlane.xlu0 %321
    %v323 = vsel %vm307, %v319, 0.0
    %324 = vadd.xlane.f32.xlu0 %v323
    %v325 = vpop.xlane.xlu0 %324
    %v326 = vrcp.pop %v322
    %v327 = vrcp.pop %v325
    %v328 = vmul.f32 %v317, %v326
    %v329 = vmul.f32 %v319, %v327
    %330 = vrot.lane.b32.xlu0 %v209, 64
    %v331 = vpop.permute.xlu0 %330
    %332 = vrot.lane.b32.xlu0 %v214, 64
    %v333 = vpop.permute.xlu0 %332
    %v337 = vsel %vm307, %v328, 0
    %v340 = vsel %vm307, %v329, 0
    %342 = vmatprep.subr.mxu0 0.0
    %343 = vmatpush1.msra.mxu0 0.0
    %344 = vmatprep.subr.mxu0 0.0
    %345 = vmatpush1.msra.mxu0 0.0
    %346 = vmatprep.subr.mxu0 0.0
    %347 = vmatpush1.msra.mxu0 0.0
    %348 = vmatprep.subr.mxu0 0.0
    %349 = vmatpush1.msra.mxu0 0.0
    %350 = vmatprep.subr.mxu0 0.0
    %351 = vmatpush1.msra.mxu0 0.0
    %352 = vmatprep.subr.mxu0 0.0
    %353 = vmatpush1.msra.mxu0 0.0
    %354 = vmatprep.subr.mxu0 0.0
    %355 = vmatpush1.msra.mxu0 0.0
    %356 = vmatprep.subr.mxu0 0.0
    %357 = vmatpush1.msra.mxu0 0.0
    %358 = vmatprep.subr.mxu0 0.0
    %359 = vmatpush1.msra.mxu0 0.0
    %360 = vmatprep.subr.mxu0 0.0
    %361 = vmatpush1.msra.mxu0 0.0
    %362 = vmatprep.subr.mxu0 0.0
    %363 = vmatpush1.msra.mxu0 0.0
    %364 = vmatprep.subr.mxu0 0.0
    %365 = vmatpush1.msra.mxu0 0.0
    %366 = vmatprep.subr.mxu0 0.0
    %367 = vmatpush1.msra.mxu0 0.0
    %368 = vmatprep.subr.mxu0 0.0
    %369 = vmatpush1.msra.mxu0 0.0
    %370 = vmatprep.subr.mxu0 0.0
    %371 = vmatpush1.msra.mxu0 %v333
    %372 = vmatprep.subr.mxu0 0.0
    %373 = vmatpush1.msra.mxu0 %v331
    %374 = vmatprep.subr.mxu0 0.0
    %375 = vmatpush2.msra.mxu0 0.0
    %376 = vmatprep.subr.mxu0 0.0
    %377 = vmatpush2.msra.mxu0 0.0
    %378 = vmatprep.subr.mxu0 0.0
    %379 = vmatpush2.msra.mxu0 0.0
    %380 = vmatprep.subr.mxu0 0.0
    %381 = vmatpush2.msra.mxu0 0.0
    %382 = vmatprep.subr.mxu0 0.0
    %383 = vmatpush2.msra.mxu0 0.0
    %384 = vmatprep.subr.mxu0 0.0
    %385 = vmatpush2.msra.mxu0 0.0
    %386 = vmatprep.subr.mxu0 0.0
    %387 = vmatpush2.msra.mxu0 0.0
    %388 = vmatprep.subr.mxu0 0.0
    %389 = vmatpush2.msra.mxu0 0.0
    %390 = vmatprep.subr.mxu0 0.0
    %391 = vmatpush2.msra.mxu0 0.0
    %392 = vmatprep.subr.mxu0 0.0
    %393 = vmatpush2.msra.mxu0 0.0
    %394 = vmatprep.subr.mxu0 0.0
    %395 = vmatpush2.msra.mxu0 0.0
    %396 = vmatprep.subr.mxu0 0.0
    %397 = vmatpush2.msra.mxu0 0.0
    %398 = vmatprep.subr.mxu0 0.0
    %399 = vmatpush2.msra.mxu0 0.0
    %400 = vmatprep.subr.mxu0 0.0
    %401 = vmatpush2.msra.mxu0 0.0
    %402 = vmatprep.subr.mxu0 0.0
    %403 = vmatpush2.msra.mxu0 0.0
    %404 = vmatprep.subr.mxu0 0.0
    %405 = vmatpush2.msra.mxu0 0.0
    %406 = vmatprep.mubr.f32.mxu0 0.0
    %407 = vmatmul.mubr.f32.gmra.mxu0 %v337
    %v408 = vpop.f32.mrf.mxu0
    %v409 = vadd.f32 0.0, %v408
    %v410 = vpop.f32.mrf.mxu0
    %411 = vmatprep.mubr.f32.mxu0 0.0
    %412 = vmatmul.mubr.f32.gmra.mxu0 %v340
    %v413 = vpop.f32.mrf.mxu0
    %v414 = vadd.f32 0.0, %v413
    %v415 = vpop.f32.mrf.mxu0
    %416 = vdwg.mxu0
    %417 = vrot.lane.b32.xlu0 %v209, 120
    %v418 = vpop.permute.xlu0 %417
    %419 = vrot.lane.b32.xlu0 %v214, 120
    %v420 = vpop.permute.xlu0 %419
    %421 = vrot.lane.b32.xlu0 %v209, 88
    %v422 = vpop.permute.xlu0 %421
    %423 = vrot.lane.b32.xlu0 %v214, 88
    %v424 = vpop.permute.xlu0 %423
    %v425 = vsel %vm223, %v418, 0
    %v427 = vsel %vm223, %v420, 0
    %v429 = vsel %vm223, %v422, 0
    %v431 = vsel %vm223, %v424, 0
    %433 = vmatprep.subr.mxu0 0.0
    %434 = vmatpush1.xpose.msra.mxu0 0.0
    %435 = vmatprep.subr.mxu0 0.0
    %436 = vmatpush1.xpose.msra.mxu0 0.0
    %437 = vmatprep.subr.mxu0 0.0
    %438 = vmatpush1.xpose.msra.mxu0 0.0
    %439 = vmatprep.subr.mxu0 0.0
    %440 = vmatpush1.xpose.msra.mxu0 0.0
    %441 = vmatprep.subr.mxu0 0.0
    %442 = vmatpush1.xpose.msra.mxu0 0.0
    %443 = vmatprep.subr.mxu0 0.0
    %444 = vmatpush1.xpose.msra.mxu0 0.0
    %445 = vmatprep.subr.mxu0 0.0
    %446 = vmatpush1.xpose.msra.mxu0 0.0
    %447 = vmatprep.subr.mxu0 0.0
    %448 = vmatpush1.xpose.msra.mxu0 0.0
    %449 = vmatprep.subr.mxu0 0.0
    %450 = vmatpush1.xpose.msra.mxu0 0.0
    %451 = vmatprep.subr.mxu0 0.0
    %452 = vmatpush1.xpose.msra.mxu0 0.0
    %453 = vmatprep.subr.mxu0 0.0
    %454 = vmatpush1.xpose.msra.mxu0 0.0
    %455 = vmatprep.subr.mxu0 0.0
    %456 = vmatpush1.xpose.msra.mxu0 0.0
    %457 = vmatprep.subr.mxu0 0.0
    %458 = vmatpush1.xpose.msra.mxu0 0.0
    %459 = vmatprep.subr.mxu0 0.0
    %460 = vmatpush1.xpose.msra.mxu0 0.0
    %461 = vmatprep.subr.mxu0 0.0
    %462 = vmatpush1.xpose.msra.mxu0 %v431
    %463 = vmatprep.subr.mxu0 0.0
    %464 = vmatpush1.xpose.msra.mxu0 %v429
    %465 = vmatprep.subr.mxu0 0.0
    %466 = vmatpush2.xpose.msra.mxu0 0.0
    %467 = vmatprep.subr.mxu0 0.0
    %468 = vmatpush2.xpose.msra.mxu0 0.0
    %469 = vmatprep.subr.mxu0 0.0
    %470 = vmatpush2.xpose.msra.mxu0 0.0
    %471 = vmatprep.subr.mxu0 0.0
    %472 = vmatpush2.xpose.msra.mxu0 0.0
    %473 = vmatprep.subr.mxu0 0.0
    %474 = vmatpush2.xpose.msra.mxu0 0.0
    %475 = vmatprep.subr.mxu0 0.0
    %476 = vmatpush2.xpose.msra.mxu0 0.0
    %477 = vmatprep.subr.mxu0 0.0
    %478 = vmatpush2.xpose.msra.mxu0 0.0
    %479 = vmatprep.subr.mxu0 0.0
    %480 = vmatpush2.xpose.msra.mxu0 0.0
    %481 = vmatprep.subr.mxu0 0.0
    %482 = vmatpush2.xpose.msra.mxu0 0.0
    %483 = vmatprep.subr.mxu0 0.0
    %484 = vmatpush2.xpose.msra.mxu0 0.0
    %485 = vmatprep.subr.mxu0 0.0
    %486 = vmatpush2.xpose.msra.mxu0 0.0
    %487 = vmatprep.subr.mxu0 0.0
    %488 = vmatpush2.xpose.msra.mxu0 0.0
    %489 = vmatprep.subr.mxu0 0.0
    %490 = vmatpush2.xpose.msra.mxu0 0.0
    %491 = vmatprep.subr.mxu0 0.0
    %492 = vmatpush2.xpose.msra.mxu0 0.0
    %493 = vmatprep.subr.mxu0 0.0
    %494 = vmatpush2.xpose.msra.mxu0 0.0
    %495 = vmatprep.subr.mxu0 0.0
    %496 = vmatpush2.xpose.msra.mxu0 0.0
    %497 = vmatprep.mubr.f32.mxu0 0.0
    %498 = vmatmul.mubr.f32.gmra.mxu0 %v425
    %v499 = vpop.f32.mrf.mxu0
    %v500 = vadd.f32 %v68, %v499
    %v501 = vpop.f32.mrf.mxu0
    %502 = vmatprep.mubr.f32.mxu0 0.0
    %503 = vmatmul.mubr.f32.gmra.mxu0 %v427
    %v504 = vpop.f32.mrf.mxu0
    %v505 = vadd.f32 %v69, %v504
    %v506 = vpop.f32.mrf.mxu0
    %507 = vdwg.mxu0
    %v508 = vsel %vm307, %v500, -inf
    %509 = vmax.xlane.f32.xlu0 %v508
    %v510 = vpop.xlane.xlu0 %509
    %v511 = vsel %vm307, %v505, -inf
    %512 = vmax.xlane.f32.xlu0 %v511
    %v513 = vpop.xlane.xlu0 %512
    %v514 = vsub.f32 %v500, %v510
    %v515 = vsub.f32 %v505, %v513
    %v516 = vmul.f32 %v514, 1.442695
    %v517 = vpow.pop %v516
    %v518 = vmul.f32 %v515, 1.442695
    %v519 = vpow.pop %v518
    %v520 = vsel %vm307, %v517, 0.0
    %521 = vadd.xlane.f32.xlu0 %v520
    %v522 = vpop.xlane.xlu0 %521
    %v523 = vsel %vm307, %v519, 0.0
    %524 = vadd.xlane.f32.xlu0 %v523
    %v525 = vpop.xlane.xlu0 %524
    %v526 = vrcp.pop %v522
    %v527 = vrcp.pop %v525
    %v528 = vmul.f32 %v517, %v526
    %v529 = vmul.f32 %v519, %v527
    %530 = vrot.lane.b32.xlu0 %v209, 56
    %v531 = vpop.permute.xlu0 %530
    %532 = vrot.lane.b32.xlu0 %v214, 56
    %v533 = vpop.permute.xlu0 %532
    %v537 = vsel %vm307, %v528, 0
    %v540 = vsel %vm307, %v529, 0
    %542 = vmatprep.subr.mxu0 0.0
    %543 = vmatpush1.msra.mxu0 0.0
    %544 = vmatprep.subr.mxu0 0.0
    %545 = vmatpush1.msra.mxu0 0.0
    %546 = vmatprep.subr.mxu0 0.0
    %547 = vmatpush1.msra.mxu0 0.0
    %548 = vmatprep.subr.mxu0 0.0
    %549 = vmatpush1.msra.mxu0 0.0
    %550 = vmatprep.subr.mxu0 0.0
    %551 = vmatpush1.msra.mxu0 0.0
    %552 = vmatprep.subr.mxu0 0.0
    %553 = vmatpush1.msra.mxu0 0.0
    %554 = vmatprep.subr.mxu0 0.0
    %555 = vmatpush1.msra.mxu0 0.0
    %556 = vmatprep.subr.mxu0 0.0
    %557 = vmatpush1.msra.mxu0 0.0
    %558 = vmatprep.subr.mxu0 0.0
    %559 = vmatpush1.msra.mxu0 0.0
    %560 = vmatprep.subr.mxu0 0.0
    %561 = vmatpush1.msra.mxu0 0.0
    %562 = vmatprep.subr.mxu0 0.0
    %563 = vmatpush1.msra.mxu0 0.0
    %564 = vmatprep.subr.mxu0 0.0
    %565 = vmatpush1.msra.mxu0 0.0
    %566 = vmatprep.subr.mxu0 0.0
    %567 = vmatpush1.msra.mxu0 0.0
    %568 = vmatprep.subr.mxu0 0.0
    %569 = vmatpush1.msra.mxu0 0.0
    %570 = vmatprep.subr.mxu0 0.0
    %571 = vmatpush1.msra.mxu0 %v533
    %572 = vmatprep.subr.mxu0 0.0
    %573 = vmatpush1.msra.mxu0 %v531
    %574 = vmatprep.subr.mxu0 0.0
    %575 = vmatpush2.msra.mxu0 0.0
    %576 = vmatprep.subr.mxu0 0.0
    %577 = vmatpush2.msra.mxu0 0.0
    %578 = vmatprep.subr.mxu0 0.0
    %579 = vmatpush2.msra.mxu0 0.0
    %580 = vmatprep.subr.mxu0 0.0
    %581 = vmatpush2.msra.mxu0 0.0
    %582 = vmatprep.subr.mxu0 0.0
    %583 = vmatpush2.msra.mxu0 0.0
    %584 = vmatprep.subr.mxu0 0.0
    %585 = vmatpush2.msra.mxu0 0.0
    %586 = vmatprep.subr.mxu0 0.0
    %587 = vmatpush2.msra.mxu0 0.0
    %588 = vmatprep.subr.mxu0 0.0
    %589 = vmatpush2.msra.mxu0 0.0
    %590 = vmatprep.subr.mxu0 0.0
    %591 = vmatpush2.msra.mxu0 0.0
    %592 = vmatprep.subr.mxu0 0.0
    %593 = vmatpush2.msra.mxu0 0.0
    %594 = vmatprep.subr.mxu0 0.0
    %595 = vmatpush2.msra.mxu0 0.0
    %596 = vmatprep.subr.mxu0 0.0
    %597 = vmatpush2.msra.mxu0 0.0
    %598 = vmatprep.subr.mxu0 0.0
    %599 = vmatpush2.msra.mxu0 0.0
    %600 = vmatprep.subr.mxu0 0.0
    %601 = vmatpush2.msra.mxu0 0.0
    %602 = vmatprep.subr.mxu0 0.0
    %603 = vmatpush2.msra.mxu0 0.0
    %604 = vmatprep.subr.mxu0 0.0
    %605 = vmatpush2.msra.mxu0 0.0
    %606 = vmatprep.mubr.f32.mxu0 0.0
    %607 = vmatmul.mubr.f32.gmra.mxu0 %v537
    %v608 = vpop.f32.mrf.mxu0
    %v609 = vadd.f32 0.0, %v608
    %v610 = vpop.f32.mrf.mxu0
    %611 = vmatprep.mubr.f32.mxu0 0.0
    %612 = vmatmul.mubr.f32.gmra.mxu0 %v540
    %v613 = vpop.f32.mrf.mxu0
    %v614 = vadd.f32 0.0, %v613
    %v615 = vpop.f32.mrf.mxu0
    %616 = vdwg.mxu0
    %617 = vrot.lane.b32.xlu0 %v209, 112
    %v618 = vpop.permute.xlu0 %617
    %619 = vrot.lane.b32.xlu0 %v214, 112
    %v620 = vpop.permute.xlu0 %619
    %621 = vrot.lane.b32.xlu0 %v209, 80
    %v622 = vpop.permute.xlu0 %621
    %623 = vrot.lane.b32.xlu0 %v214, 80
    %v624 = vpop.permute.xlu0 %623
    %v625 = vsel %vm223, %v618, 0
    %v627 = vsel %vm223, %v620, 0
    %v629 = vsel %vm223, %v622, 0
    %v631 = vsel %vm223, %v624, 0
    %633 = vmatprep.subr.mxu0 0.0
    %634 = vmatpush1.xpose.msra.mxu0 0.0
    %635 = vmatprep.subr.mxu0 0.0
    %636 = vmatpush1.xpose.msra.mxu0 0.0
    %637 = vmatprep.subr.mxu0 0.0
    %638 = vmatpush1.xpose.msra.mxu0 0.0
    %639 = vmatprep.subr.mxu0 0.0
    %640 = vmatpush1.xpose.msra.mxu0 0.0
    %641 = vmatprep.subr.mxu0 0.0
    %642 = vmatpush1.xpose.msra.mxu0 0.0
    %643 = vmatprep.subr.mxu0 0.0
    %644 = vmatpush1.xpose.msra.mxu0 0.0
    %645 = vmatprep.subr.mxu0 0.0
    %646 = vmatpush1.xpose.msra.mxu0 0.0
    %647 = vmatprep.subr.mxu0 0.0
    %648 = vmatpush1.xpose.msra.mxu0 0.0
    %649 = vmatprep.subr.mxu0 0.0
    %650 = vmatpush1.xpose.msra.mxu0 0.0
    %651 = vmatprep.subr.mxu0 0.0
    %652 = vmatpush1.xpose.msra.mxu0 0.0
    %653 = vmatprep.subr.mxu0 0.0
    %654 = vmatpush1.xpose.msra.mxu0 0.0
    %655 = vmatprep.subr.mxu0 0.0
    %656 = vmatpush1.xpose.msra.mxu0 0.0
    %657 = vmatprep.subr.mxu0 0.0
    %658 = vmatpush1.xpose.msra.mxu0 0.0
    %659 = vmatprep.subr.mxu0 0.0
    %660 = vmatpush1.xpose.msra.mxu0 0.0
    %661 = vmatprep.subr.mxu0 0.0
    %662 = vmatpush1.xpose.msra.mxu0 %v631
    %663 = vmatprep.subr.mxu0 0.0
    %664 = vmatpush1.xpose.msra.mxu0 %v629
    %665 = vmatprep.subr.mxu0 0.0
    %666 = vmatpush2.xpose.msra.mxu0 0.0
    %667 = vmatprep.subr.mxu0 0.0
    %668 = vmatpush2.xpose.msra.mxu0 0.0
    %669 = vmatprep.subr.mxu0 0.0
    %670 = vmatpush2.xpose.msra.mxu0 0.0
    %671 = vmatprep.subr.mxu0 0.0
    %672 = vmatpush2.xpose.msra.mxu0 0.0
    %673 = vmatprep.subr.mxu0 0.0
    %674 = vmatpush2.xpose.msra.mxu0 0.0
    %675 = vmatprep.subr.mxu0 0.0
    %676 = vmatpush2.xpose.msra.mxu0 0.0
    %677 = vmatprep.subr.mxu0 0.0
    %678 = vmatpush2.xpose.msra.mxu0 0.0
    %679 = vmatprep.subr.mxu0 0.0
    %680 = vmatpush2.xpose.msra.mxu0 0.0
    %681 = vmatprep.subr.mxu0 0.0
    %682 = vmatpush2.xpose.msra.mxu0 0.0
    %683 = vmatprep.subr.mxu0 0.0
    %684 = vmatpush2.xpose.msra.mxu0 0.0
    %685 = vmatprep.subr.mxu0 0.0
    %686 = vmatpush2.xpose.msra.mxu0 0.0
    %687 = vmatprep.subr.mxu0 0.0
    %688 = vmatpush2.xpose.msra.mxu0 0.0
    %689 = vmatprep.subr.mxu0 0.0
    %690 = vmatpush2.xpose.msra.mxu0 0.0
    %691 = vmatprep.subr.mxu0 0.0
    %692 = vmatpush2.xpose.msra.mxu0 0.0
    %693 = vmatprep.subr.mxu0 0.0
    %694 = vmatpush2.xpose.msra.mxu0 0.0
    %695 = vmatprep.subr.mxu0 0.0
    %696 = vmatpush2.xpose.msra.mxu0 0.0
    %697 = vmatprep.mubr.f32.mxu0 0.0
    %698 = vmatmul.mubr.f32.gmra.mxu0 %v625
    %v699 = vpop.f32.mrf.mxu0
    %v700 = vadd.f32 %v68, %v699
    %v701 = vpop.f32.mrf.mxu0
    %702 = vmatprep.mubr.f32.mxu0 0.0
    %703 = vmatmul.mubr.f32.gmra.mxu0 %v627
    %v704 = vpop.f32.mrf.mxu0
    %v705 = vadd.f32 %v69, %v704
    %v706 = vpop.f32.mrf.mxu0
    %707 = vdwg.mxu0
    %v708 = vsel %vm307, %v700, -inf
    %709 = vmax.xlane.f32.xlu0 %v708
    %v710 = vpop.xlane.xlu0 %709
    %v711 = vsel %vm307, %v705, -inf
    %712 = vmax.xlane.f32.xlu0 %v711
    %v713 = vpop.xlane.xlu0 %712
    %v714 = vsub.f32 %v700, %v710
    %v715 = vsub.f32 %v705, %v713
    %v716 = vmul.f32 %v714, 1.442695
    %v717 = vpow.pop %v716
    %v718 = vmul.f32 %v715, 1.442695
    %v719 = vpow.pop %v718
    %v720 = vsel %vm307, %v717, 0.0
    %721 = vadd.xlane.f32.xlu0 %v720
    %v722 = vpop.xlane.xlu0 %721
    %v723 = vsel %vm307, %v719, 0.0
    %724 = vadd.xlane.f32.xlu0 %v723
    %v725 = vpop.xlane.xlu0 %724
    %v726 = vrcp.pop %v722
    %v727 = vrcp.pop %v725
    %v728 = vmul.f32 %v717, %v726
    %v729 = vmul.f32 %v719, %v727
    %730 = vrot.lane.b32.xlu0 %v209, 48
    %v731 = vpop.permute.xlu0 %730
    %732 = vrot.lane.b32.xlu0 %v214, 48
    %v733 = vpop.permute.xlu0 %732
    %v737 = vsel %vm307, %v728, 0
    %v740 = vsel %vm307, %v729, 0
    %742 = vmatprep.subr.mxu0 0.0
    %743 = vmatpush1.msra.mxu0 0.0
    %744 = vmatprep.subr.mxu0 0.0
    %745 = vmatpush1.msra.mxu0 0.0
    %746 = vmatprep.subr.mxu0 0.0
    %747 = vmatpush1.msra.mxu0 0.0
    %748 = vmatprep.subr.mxu0 0.0
    %749 = vmatpush1.msra.mxu0 0.0
    %750 = vmatprep.subr.mxu0 0.0
    %751 = vmatpush1.msra.mxu0 0.0
    %752 = vmatprep.subr.mxu0 0.0
    %753 = vmatpush1.msra.mxu0 0.0
    %754 = vmatprep.subr.mxu0 0.0
    %755 = vmatpush1.msra.mxu0 0.0
    %756 = vmatprep.subr.mxu0 0.0
    %757 = vmatpush1.msra.mxu0 0.0
    %758 = vmatprep.subr.mxu0 0.0
    %759 = vmatpush1.msra.mxu0 0.0
    %760 = vmatprep.subr.mxu0 0.0
    %761 = vmatpush1.msra.mxu0 0.0
    %762 = vmatprep.subr.mxu0 0.0
    %763 = vmatpush1.msra.mxu0 0.0
    %764 = vmatprep.subr.mxu0 0.0
    %765 = vmatpush1.msra.mxu0 0.0
    %766 = vmatprep.subr.mxu0 0.0
    %767 = vmatpush1.msra.mxu0 0.0
    %768 = vmatprep.subr.mxu0 0.0
    %769 = vmatpush1.msra.mxu0 0.0
    %770 = vmatprep.subr.mxu0 0.0
    %771 = vmatpush1.msra.mxu0 %v733
    %772 = vmatprep.subr.mxu0 0.0
    %773 = vmatpush1.msra.mxu0 %v731
    %774 = vmatprep.subr.mxu0 0.0
    %775 = vmatpush2.msra.mxu0 0.0
    %776 = vmatprep.subr.mxu0 0.0
    %777 = vmatpush2.msra.mxu0 0.0
    %778 = vmatprep.subr.mxu0 0.0
    %779 = vmatpush2.msra.mxu0 0.0
    %780 = vmatprep.subr.mxu0 0.0
    %781 = vmatpush2.msra.mxu0 0.0
    %782 = vmatprep.subr.mxu0 0.0
    %783 = vmatpush2.msra.mxu0 0.0
    %784 = vmatprep.subr.mxu0 0.0
    %785 = vmatpush2.msra.mxu0 0.0
    %786 = vmatprep.subr.mxu0 0.0
    %787 = vmatpush2.msra.mxu0 0.0
    %788 = vmatprep.subr.mxu0 0.0
    %789 = vmatpush2.msra.mxu0 0.0
    %790 = vmatprep.subr.mxu0 0.0
    %791 = vmatpush2.msra.mxu0 0.0
    %792 = vmatprep.subr.mxu0 0.0
    %793 = vmatpush2.msra.mxu0 0.0
    %794 = vmatprep.subr.mxu0 0.0
    %795 = vmatpush2.msra.mxu0 0.0
    %796 = vmatprep.subr.mxu0 0.0
    %797 = vmatpush2.msra.mxu0 0.0
    %798 = vmatprep.subr.mxu0 0.0
    %799 = vmatpush2.msra.mxu0 0.0
    %800 = vmatprep.subr.mxu0 0.0
    %801 = vmatpush2.msra.mxu0 0.0
    %802 = vmatprep.subr.mxu0 0.0
    %803 = vmatpush2.msra.mxu0 0.0
    %804 = vmatprep.subr.mxu0 0.0
    %805 = vmatpush2.msra.mxu0 0.0
    %806 = vmatprep.mubr.f32.mxu0 0.0
    %807 = vmatmul.mubr.f32.gmra.mxu0 %v737
    %v808 = vpop.f32.mrf.mxu0
    %v809 = vadd.f32 0.0, %v808
    %v810 = vpop.f32.mrf.mxu0
    %811 = vmatprep.mubr.f32.mxu0 0.0
    %812 = vmatmul.mubr.f32.gmra.mxu0 %v740
    %v813 = vpop.f32.mrf.mxu0
    %v814 = vadd.f32 0.0, %v813
    %v815 = vpop.f32.mrf.mxu0
    %816 = vdwg.mxu0
    %817 = vrot.lane.b32.xlu0 %v209, 104
    %v818 = vpop.permute.xlu0 %817
    %819 = vrot.lane.b32.xlu0 %v214, 104
    %v820 = vpop.permute.xlu0 %819
    %821 = vrot.lane.b32.xlu0 %v209, 72
    %v822 = vpop.permute.xlu0 %821
    %823 = vrot.lane.b32.xlu0 %v214, 72
    %v824 = vpop.permute.xlu0 %823
    %v825 = vsel %vm223, %v818, 0
    %v827 = vsel %vm223, %v820, 0
    %v829 = vsel %vm223, %v822, 0
    %v831 = vsel %vm223, %v824, 0
    %833 = vmatprep.subr.mxu0 0.0
    %834 = vmatpush1.xpose.msra.mxu0 0.0
    %835 = vmatprep.subr.mxu0 0.0
    %836 = vmatpush1.xpose.msra.mxu0 0.0
    %837 = vmatprep.subr.mxu0 0.0
    %838 = vmatpush1.xpose.msra.mxu0 0.0
    %839 = vmatprep.subr.mxu0 0.0
    %840 = vmatpush1.xpose.msra.mxu0 0.0
    %841 = vmatprep.subr.mxu0 0.0
    %842 = vmatpush1.xpose.msra.mxu0 0.0
    %843 = vmatprep.subr.mxu0 0.0
    %844 = vmatpush1.xpose.msra.mxu0 0.0
    %845 = vmatprep.subr.mxu0 0.0
    %846 = vmatpush1.xpose.msra.mxu0 0.0
    %847 = vmatprep.subr.mxu0 0.0
    %848 = vmatpush1.xpose.msra.mxu0 0.0
    %849 = vmatprep.subr.mxu0 0.0
    %850 = vmatpush1.xpose.msra.mxu0 0.0
    %851 = vmatprep.subr.mxu0 0.0
    %852 = vmatpush1.xpose.msra.mxu0 0.0
    %853 = vmatprep.subr.mxu0 0.0
    %854 = vmatpush1.xpose.msra.mxu0 0.0
    %855 = vmatprep.subr.mxu0 0.0
    %856 = vmatpush1.xpose.msra.mxu0 0.0
    %857 = vmatprep.subr.mxu0 0.0
    %858 = vmatpush1.xpose.msra.mxu0 0.0
    %859 = vmatprep.subr.mxu0 0.0
    %860 = vmatpush1.xpose.msra.mxu0 0.0
    %861 = vmatprep.subr.mxu0 0.0
    %862 = vmatpush1.xpose.msra.mxu0 %v831
    %863 = vmatprep.subr.mxu0 0.0
    %864 = vmatpush1.xpose.msra.mxu0 %v829
    %865 = vmatprep.subr.mxu0 0.0
    %866 = vmatpush2.xpose.msra.mxu0 0.0
    %867 = vmatprep.subr.mxu0 0.0
    %868 = vmatpush2.xpose.msra.mxu0 0.0
    %869 = vmatprep.subr.mxu0 0.0
    %870 = vmatpush2.xpose.msra.mxu0 0.0
    %871 = vmatprep.subr.mxu0 0.0
    %872 = vmatpush2.xpose.msra.mxu0 0.0
    %873 = vmatprep.subr.mxu0 0.0
    %874 = vmatpush2.xpose.msra.mxu0 0.0
    %875 = vmatprep.subr.mxu0 0.0
    %876 = vmatpush2.xpose.msra.mxu0 0.0
    %877 = vmatprep.subr.mxu0 0.0
    %878 = vmatpush2.xpose.msra.mxu0 0.0
    %879 = vmatprep.subr.mxu0 0.0
    %880 = vmatpush2.xpose.msra.mxu0 0.0
    %881 = vmatprep.subr.mxu0 0.0
    %882 = vmatpush2.xpose.msra.mxu0 0.0
    %883 = vmatprep.subr.mxu0 0.0
    %884 = vmatpush2.xpose.msra.mxu0 0.0
    %885 = vmatprep.subr.mxu0 0.0
    %886 = vmatpush2.xpose.msra.mxu0 0.0
    %887 = vmatprep.subr.mxu0 0.0
    %888 = vmatpush2.xpose.msra.mxu0 0.0
    %889 = vmatprep.subr.mxu0 0.0
    %890 = vmatpush2.xpose.msra.mxu0 0.0
    %891 = vmatprep.subr.mxu0 0.0
    %892 = vmatpush2.xpose.msra.mxu0 0.0
    %893 = vmatprep.subr.mxu0 0.0
    %894 = vmatpush2.xpose.msra.mxu0 0.0
    %895 = vmatprep.subr.mxu0 0.0
    %896 = vmatpush2.xpose.msra.mxu0 0.0
    %897 = vmatprep.mubr.f32.mxu0 0.0
    %898 = vmatmul.mubr.f32.gmra.mxu0 %v825
    %v899 = vpop.f32.mrf.mxu0
    %v900 = vadd.f32 %v68, %v899
    %v901 = vpop.f32.mrf.mxu0
    %902 = vmatprep.mubr.f32.mxu0 0.0
    %903 = vmatmul.mubr.f32.gmra.mxu0 %v827
    %v904 = vpop.f32.mrf.mxu0
    %v905 = vadd.f32 %v69, %v904
    %v906 = vpop.f32.mrf.mxu0
    %907 = vdwg.mxu0
    %v908 = vsel %vm307, %v900, -inf
    %909 = vmax.xlane.f32.xlu0 %v908
    %v910 = vpop.xlane.xlu0 %909
    %v911 = vsel %vm307, %v905, -inf
    %912 = vmax.xlane.f32.xlu0 %v911
    %v913 = vpop.xlane.xlu0 %912
    %v914 = vsub.f32 %v900, %v910
    %v915 = vsub.f32 %v905, %v913
    %v916 = vmul.f32 %v914, 1.442695
    %v917 = vpow.pop %v916
    %v918 = vmul.f32 %v915, 1.442695
    %v919 = vpow.pop %v918
    %v920 = vsel %vm307, %v917, 0.0
    %921 = vadd.xlane.f32.xlu0 %v920
    %v922 = vpop.xlane.xlu0 %921
    %v923 = vsel %vm307, %v919, 0.0
    %924 = vadd.xlane.f32.xlu0 %v923
    %v925 = vpop.xlane.xlu0 %924
    %v926 = vrcp.pop %v922
    %v927 = vrcp.pop %v925
    %v928 = vmul.f32 %v917, %v926
    %v929 = vmul.f32 %v919, %v927
    %930 = vrot.lane.b32.xlu0 %v209, 40
    %v931 = vpop.permute.xlu0 %930
    %932 = vrot.lane.b32.xlu0 %v214, 40
    %v933 = vpop.permute.xlu0 %932
    %v937 = vsel %vm307, %v928, 0
    %v940 = vsel %vm307, %v929, 0
    %942 = vmatprep.subr.mxu0 0.0
    %943 = vmatpush1.msra.mxu0 0.0
    %944 = vmatprep.subr.mxu0 0.0
    %945 = vmatpush1.msra.mxu0 0.0
    %946 = vmatprep.subr.mxu0 0.0
    %947 = vmatpush1.msra.mxu0 0.0
    %948 = vmatprep.subr.mxu0 0.0
    %949 = vmatpush1.msra.mxu0 0.0
    %950 = vmatprep.subr.mxu0 0.0
    %951 = vmatpush1.msra.mxu0 0.0
    %952 = vmatprep.subr.mxu0 0.0
    %953 = vmatpush1.msra.mxu0 0.0
    %954 = vmatprep.subr.mxu0 0.0
    %955 = vmatpush1.msra.mxu0 0.0
    %956 = vmatprep.subr.mxu0 0.0
    %957 = vmatpush1.msra.mxu0 0.0
    %958 = vmatprep.subr.mxu0 0.0
    %959 = vmatpush1.msra.mxu0 0.0
    %960 = vmatprep.subr.mxu0 0.0
    %961 = vmatpush1.msra.mxu0 0.0
    %962 = vmatprep.subr.mxu0 0.0
    %963 = vmatpush1.msra.mxu0 0.0
    %964 = vmatprep.subr.mxu0 0.0
    %965 = vmatpush1.msra.mxu0 0.0
    %966 = vmatprep.subr.mxu0 0.0
    %967 = vmatpush1.msra.mxu0 0.0
    %968 = vmatprep.subr.mxu0 0.0
    %969 = vmatpush1.msra.mxu0 0.0
    %970 = vmatprep.subr.mxu0 0.0
    %971 = vmatpush1.msra.mxu0 %v933
    %972 = vmatprep.subr.mxu0 0.0
    %973 = vmatpush1.msra.mxu0 %v931
    %974 = vmatprep.subr.mxu0 0.0
    %975 = vmatpush2.msra.mxu0 0.0
    %976 = vmatprep.subr.mxu0 0.0
    %977 = vmatpush2.msra.mxu0 0.0
    %978 = vmatprep.subr.mxu0 0.0
    %979 = vmatpush2.msra.mxu0 0.0
    %980 = vmatprep.subr.mxu0 0.0
    %981 = vmatpush2.msra.mxu0 0.0
    %982 = vmatprep.subr.mxu0 0.0
    %983 = vmatpush2.msra.mxu0 0.0
    %984 = vmatprep.subr.mxu0 0.0
    %985 = vmatpush2.msra.mxu0 0.0
    %986 = vmatprep.subr.mxu0 0.0
    %987 = vmatpush2.msra.mxu0 0.0
    %988 = vmatprep.subr.mxu0 0.0
    %989 = vmatpush2.msra.mxu0 0.0
    %990 = vmatprep.subr.mxu0 0.0
    %991 = vmatpush2.msra.mxu0 0.0
    %992 = vmatprep.subr.mxu0 0.0
    %993 = vmatpush2.msra.mxu0 0.0
    %994 = vmatprep.subr.mxu0 0.0
    %995 = vmatpush2.msra.mxu0 0.0
    %996 = vmatprep.subr.mxu0 0.0
    %997 = vmatpush2.msra.mxu0 0.0
    %998 = vmatprep.subr.mxu0 0.0
    %999 = vmatpush2.msra.mxu0 0.0
    %1000 = vmatprep.subr.mxu0 0.0
    %1001 = vmatpush2.msra.mxu0 0.0
    %1002 = vmatprep.subr.mxu0 0.0
    %1003 = vmatpush2.msra.mxu0 0.0
    %1004 = vmatprep.subr.mxu0 0.0
    %1005 = vmatpush2.msra.mxu0 0.0
    %1006 = vmatprep.mubr.f32.mxu0 0.0
    %1007 = vmatmul.mubr.f32.gmra.mxu0 %v937
    %v1008 = vpop.f32.mrf.mxu0
    %v1009 = vadd.f32 0.0, %v1008
    %v1010 = vpop.f32.mrf.mxu0
    %1011 = vmatprep.mubr.f32.mxu0 0.0
    %1012 = vmatmul.mubr.f32.gmra.mxu0 %v940
    %v1013 = vpop.f32.mrf.mxu0
    %v1014 = vadd.f32 0.0, %v1013
    %v1015 = vpop.f32.mrf.mxu0
    %1016 = vdwg.mxu0
    %1019 = vrot.lane.b32.xlu0 %v609, 8
    %v1020 = vpop.permute.xlu0 %1019
    %1021 = vrot.lane.b32.xlu0 %v614, 8
    %v1022 = vpop.permute.xlu0 %1021
    %1027 = vrot.lane.b32.xlu0 %v809, 16
    %v1028 = vpop.permute.xlu0 %1027
    %1029 = vrot.lane.b32.xlu0 %v814, 16
    %v1030 = vpop.permute.xlu0 %1029
    %1035 = vrot.lane.b32.xlu0 %v1009, 24
    %v1036 = vpop.permute.xlu0 %1035
    %1037 = vrot.lane.b32.xlu0 %v1014, 24
    %v1038 = vpop.permute.xlu0 %1037
    %v1041 = vsel %vm223, %v409, %v1020
    %v1042 = vsel %vm223, %v414, %v1022
    %v1043 = vsel %vm307, %v1041, %v1028
    %v1044 = vsel %vm307, %v1042, %v1030
    %vm1045 = vcmask 195584
    %v1046 = vsel %vm1045, %v1043, %v1036
    %v1047 = vsel %vm1045, %v1044, %v1038
    %v1048 = vld [vmem:[%s9] sm:$0xff]
    %v1049 = vld [vmem:[%s9 + $0x8] sm:$0xff]
    %v1050 = vld [vmem:[%s9 + $0x10] sm:$0xff]
    %v1051 = vld [vmem:[%s9 + $0x18] sm:$0xff]
    %v1053 = vsel %vm74, %v1046, 0
    %v1056 = vsel %vm74, %v1047, 0
    %1058 = vmatprep.subr.mxu0 0.0
    %1059 = vmatpush1.msra.mxu0 0.0
    %1060 = vmatprep.subr.mxu0 0.0
    %1061 = vmatpush1.msra.mxu0 0.0
    %1062 = vmatprep.subr.mxu0 0.0
    %1063 = vmatpush1.msra.mxu0 0.0
    %1064 = vmatprep.subr.mxu0 0.0
    %1065 = vmatpush1.msra.mxu0 0.0
    %1066 = vmatprep.subr.mxu0 0.0
    %1067 = vmatpush1.msra.mxu0 0.0
    %1068 = vmatprep.subr.mxu0 0.0
    %1069 = vmatpush1.msra.mxu0 0.0
    %1070 = vmatprep.subr.mxu0 0.0
    %1071 = vmatpush1.msra.mxu0 0.0
    %1072 = vmatprep.subr.mxu0 0.0
    %1073 = vmatpush1.msra.mxu0 0.0
    %1074 = vmatprep.subr.mxu0 0.0
    %1075 = vmatpush1.msra.mxu0 0.0
    %1076 = vmatprep.subr.mxu0 0.0
    %1077 = vmatpush1.msra.mxu0 0.0
    %1078 = vmatprep.subr.mxu0 0.0
    %1079 = vmatpush1.msra.mxu0 0.0
    %1080 = vmatprep.subr.mxu0 0.0
    %1081 = vmatpush1.msra.mxu0 0.0
    %1082 = vmatprep.subr.mxu0 0.0
    %1083 = vmatpush1.msra.mxu0 %v1051
    %1084 = vmatprep.subr.mxu0 0.0
    %1085 = vmatpush1.msra.mxu0 %v1050
    %1086 = vmatprep.subr.mxu0 0.0
    %1087 = vmatpush1.msra.mxu0 %v1049
    %1088 = vmatprep.subr.mxu0 0.0
    %1089 = vmatpush1.msra.mxu0 %v1048
    %1090 = vmatprep.subr.mxu0 0.0
    %1091 = vmatpush2.msra.mxu0 0.0
    %1092 = vmatprep.subr.mxu0 0.0
    %1093 = vmatpush2.msra.mxu0 0.0
    %1094 = vmatprep.subr.mxu0 0.0
    %1095 = vmatpush2.msra.mxu0 0.0
    %1096 = vmatprep.subr.mxu0 0.0
    %1097 = vmatpush2.msra.mxu0 0.0
    %1098 = vmatprep.subr.mxu0 0.0
    %1099 = vmatpush2.msra.mxu0 0.0
    %1100 = vmatprep.subr.mxu0 0.0
    %1101 = vmatpush2.msra.mxu0 0.0
    %1102 = vmatprep.subr.mxu0 0.0
    %1103 = vmatpush2.msra.mxu0 0.0
    %1104 = vmatprep.subr.mxu0 0.0
    %1105 = vmatpush2.msra.mxu0 0.0
    %1106 = vmatprep.subr.mxu0 0.0
    %1107 = vmatpush2.msra.mxu0 0.0
    %1108 = vmatprep.subr.mxu0 0.0
    %1109 = vmatpush2.msra.mxu0 0.0
    %1110 = vmatprep.subr.mxu0 0.0
    %1111 = vmatpush2.msra.mxu0 0.0
    %1112 = vmatprep.subr.mxu0 0.0
    %1113 = vmatpush2.msra.mxu0 0.0
    %1114 = vmatprep.subr.mxu0 0.0
    %1115 = vmatpush2.msra.mxu0 0.0
    %1116 = vmatprep.subr.mxu0 0.0
    %1117 = vmatpush2.msra.mxu0 0.0
    %1118 = vmatprep.subr.mxu0 0.0
    %1119 = vmatpush2.msra.mxu0 0.0
    %1120 = vmatprep.subr.mxu0 0.0
    %1121 = vmatpush2.msra.mxu0 0.0
    %1122 = vmatprep.mubr.f32.mxu0 0.0
    %1123 = vmatmul.mubr.f32.gmra.mxu0 %v1053
    %v1124 = vpop.f32.mrf.mxu0
    %v1125 = vadd.f32 0.0, %v1124
    %v1126 = vpop.f32.mrf.mxu0
    %1127 = vmatprep.mubr.f32.mxu0 0.0
    %1128 = vmatmul.mubr.f32.gmra.mxu0 %v1056
    %v1129 = vpop.f32.mrf.mxu0
    %v1130 = vadd.f32 0.0, %v1129
    %v1131 = vpop.f32.mrf.mxu0
    %1132 = vdwg.mxu0
    %v1133 = vadd.f32 %v64, %v1125
    %v1134 = vadd.f32 %v65, %v1130
    %v1135 = vld [vmem:[%s10] sm:$0x1]
    %v1137 = vlaneseq
    %v1138 = vshrl.u32 %v1137, 7
    %v1139 = vsub.s32 0, %v1138
    %v1140 = vrot.slane %v1135, %v1139
    %v1142 = vadd.f32 %v1133, %v1140
    %v1143 = vadd.f32 %v1134, %v1140
    %s1144 = sld [smem:[#allocation2 + $0x2]]
    %s1145 = sld [smem:[#allocation2 + $0x3]]
    %v1146 = vsel %vm74, %v1142, 0.0
    %1147 = vadd.xlane.f32.xlu0 %v1146
    %v1148 = vpop.xlane.xlu0 %1147
    %v1149 = vsel %vm74, %v1143, 0.0
    %1150 = vadd.xlane.f32.xlu0 %v1149
    %v1151 = vpop.xlane.xlu0 %1150
    %v1152 = vmul.f32 %v1142, %v1142
    %v1153 = vmul.f32 %v1143, %v1143
    %v1154 = vsel %vm74, %v1152, 0.0
    %1155 = vadd.xlane.f32.xlu0 %v1154
    %v1156 = vpop.xlane.xlu0 %1155
    %v1157 = vsel %vm74, %v1153, 0.0
    %1158 = vadd.xlane.f32.xlu0 %v1157
    %v1159 = vpop.xlane.xlu0 %1158
    %v1160 = vmul.f32 %v1148, 0.03125
    %v1161 = vmul.f32 %v1151, 0.03125
    %v1162 = vmul.f32 %v1148, %v1160
    %v1163 = vmul.f32 %v1151, %v1161
    %v1164 = vsub.f32 %v1156, %v1162
    %v1165 = vsub.f32 %v1159, %v1163
    %v1166 = vmul.f32 %v1164, 0.032258064
    %v1167 = vmul.f32 %v1165, 0.032258064
    %v1168 = vrsqrt.pop %v1166
    %v1169 = vmul.f32 %v1166, %v1168
    %vm1170 = vcmp.eq.f32.partialorder %v1166, inf
    %v1171 = vsel %vm1170, %v1166, %v1169
    %vm1172 = vcmp.eq.f32.partialorder %v1166, 0.0
    %v1173 = vand.u32 %v1166, 2147483648
    %v1174 = vsel %vm1172, %v1173, %v1171
    %v1175 = vrsqrt.pop %v1167
    %v1176 = vmul.f32 %v1167, %v1175
    %vm1177 = vcmp.eq.f32.partialorder %v1167, inf
    %v1178 = vsel %vm1177, %v1167, %v1176
    %vm1179 = vcmp.eq.f32.partialorder %v1167, 0.0
    %v1180 = vand.u32 %v1167, 2147483648
    %v1181 = vsel %vm1179, %v1180, %v1178
    %v1182 = vadd.f32 %v1174, 1e-06
    %v1183 = vadd.f32 %v1181, 1e-06
    %v1184 = vrcp.pop %v1182
    %v1185 = vrcp.pop %v1183
    %v1186 = vsub.f32 %v1142, %v1160
    %v1187 = vsub.f32 %v1143, %v1161
    %v1188 = vstv %s1144
    %v1189 = vmul.f32 %v1188, %v1186
    %v1190 = vmul.f32 %v1188, %v1187
    %v1191 = vmul.f32 %v1189, %v1184
    %v1192 = vmul.f32 %v1190, %v1185
    %v1193 = vstv %s1145
    %v1194 = vadd.f32 %v1191, %v1193
    %v1195 = vadd.f32 %v1192, %v1193
    %s1196 = scalar_lea.vmem %s9, 32
    %v1197 = vld [vmem:[%s1196] sm:$0xff]
    %v1198 = vld [vmem:[%s1196 + $0x8] sm:$0xff]
    %v1199 = vld [vmem:[%s1196 + $0x10] sm:$0xff]
    %v1200 = vld [vmem:[%s1196 + $0x18] sm:$0xff]
    %s1201 = scalar_lea.vmem %s10, 1
    %v1202 = vld [vmem:[%s1201] sm:$0x1]
    %v1204 = vlaneseq
    %v1205 = vshrl.u32 %v1204, 7
    %v1206 = vsub.s32 0, %v1205
    %v1207 = vrot.slane %v1202, %v1206
    %v1210 = vsel %vm74, %v1194, 0
    %v1213 = vsel %vm74, %v1195, 0
    %1215 = vmatprep.subr.mxu0 0.0
    %1216 = vmatpush1.msra.mxu0 0.0
    %1217 = vmatprep.subr.mxu0 0.0
    %1218 = vmatpush1.msra.mxu0 0.0
    %1219 = vmatprep.subr.mxu0 0.0
    %1220 = vmatpush1.msra.mxu0 0.0
    %1221 = vmatprep.subr.mxu0 0.0
    %1222 = vmatpush1.msra.mxu0 0.0
    %1223 = vmatprep.subr.mxu0 0.0
    %1224 = vmatpush1.msra.mxu0 0.0
    %1225 = vmatprep.subr.mxu0 0.0
    %1226 = vmatpush1.msra.mxu0 0.0
    %1227 = vmatprep.subr.mxu0 0.0
    %1228 = vmatpush1.msra.mxu0 0.0
    %1229 = vmatprep.subr.mxu0 0.0
    %1230 = vmatpush1.msra.mxu0 0.0
    %1231 = vmatprep.subr.mxu0 0.0
    %1232 = vmatpush1.msra.mxu0 0.0
    %1233 = vmatprep.subr.mxu0 0.0
    %1234 = vmatpush1.msra.mxu0 0.0
    %1235 = vmatprep.subr.mxu0 0.0
    %1236 = vmatpush1.msra.mxu0 0.0
    %1237 = vmatprep.subr.mxu0 0.0
    %1238 = vmatpush1.msra.mxu0 0.0
    %1239 = vmatprep.subr.mxu0 0.0
    %1240 = vmatpush1.msra.mxu0 %v1200
    %1241 = vmatprep.subr.mxu0 0.0
    %1242 = vmatpush1.msra.mxu0 %v1199
    %1243 = vmatprep.subr.mxu0 0.0
    %1244 = vmatpush1.msra.mxu0 %v1198
    %1245 = vmatprep.subr.mxu0 0.0
    %1246 = vmatpush1.msra.mxu0 %v1197
    %1247 = vmatprep.subr.mxu0 0.0
    %1248 = vmatpush2.msra.mxu0 0.0
    %1249 = vmatprep.subr.mxu0 0.0
    %1250 = vmatpush2.msra.mxu0 0.0
    %1251 = vmatprep.subr.mxu0 0.0
    %1252 = vmatpush2.msra.mxu0 0.0
    %1253 = vmatprep.subr.mxu0 0.0
    %1254 = vmatpush2.msra.mxu0 0.0
    %1255 = vmatprep.subr.mxu0 0.0
    %1256 = vmatpush2.msra.mxu0 0.0
    %1257 = vmatprep.subr.mxu0 0.0
    %1258 = vmatpush2.msra.mxu0 0.0
    %1259 = vmatprep.subr.mxu0 0.0
    %1260 = vmatpush2.msra.mxu0 0.0
    %1261 = vmatprep.subr.mxu0 0.0
    %1262 = vmatpush2.msra.mxu0 0.0
    %1263 = vmatprep.subr.mxu0 0.0
    %1264 = vmatpush2.msra.mxu0 0.0
    %1265 = vmatprep.subr.mxu0 0.0
    %1266 = vmatpush2.msra.mxu0 0.0
    %1267 = vmatprep.subr.mxu0 0.0
    %1268 = vmatpush2.msra.mxu0 0.0
    %1269 = vmatprep.subr.mxu0 0.0
    %1270 = vmatpush2.msra.mxu0 0.0
    %1271 = vmatprep.subr.mxu0 0.0
    %1272 = vmatpush2.msra.mxu0 0.0
    %1273 = vmatprep.subr.mxu0 0.0
    %1274 = vmatpush2.msra.mxu0 0.0
    %1275 = vmatprep.subr.mxu0 0.0
    %1276 = vmatpush2.msra.mxu0 0.0
    %1277 = vmatprep.subr.mxu0 0.0
    %1278 = vmatpush2.msra.mxu0 0.0
    %1279 = vmatprep.mubr.f32.mxu0 0.0
    %1280 = vmatmul.mubr.f32.gmra.mxu0 %v1210
    %v1281 = vpop.f32.mrf.mxu0
    %v1282 = vadd.f32 %v1207, %v1281
    %v1283 = vpop.f32.mrf.mxu0
    %1284 = vmatprep.mubr.f32.mxu0 0.0
    %1285 = vmatmul.mubr.f32.gmra.mxu0 %v1213
    %v1286 = vpop.f32.mrf.mxu0
    %v1287 = vadd.f32 %v1207, %v1286
    %v1288 = vpop.f32.mrf.mxu0
    %1289 = vdwg.mxu0
    %v1290 = vld [vmem:[%s7] sm:$0xff]
    %v1291 = vld [vmem:[%s7 + $0x8] sm:$0xff]
    %v1292 = vld [vmem:[%s7 + $0x10] sm:$0xff]
    %v1293 = vld [vmem:[%s7 + $0x18] sm:$0xff]
    %v1294 = vld [vmem:[%s8] sm:$0x1]
    %v1296 = vlaneseq
    %v1297 = vshrl.u32 %v1296, 7
    %v1298 = vsub.s32 0, %v1297
    %v1299 = vrot.slane %v1294, %v1298
    %v1302 = vsel %vm74, %v66, 0
    %v1305 = vsel %vm74, %v67, 0
    %1307 = vmatprep.subr.mxu0 0.0
    %1308 = vmatpush1.msra.mxu0 0.0
    %1309 = vmatprep.subr.mxu0 0.0
    %1310 = vmatpush1.msra.mxu0 0.0
    %1311 = vmatprep.subr.mxu0 0.0
    %1312 = vmatpush1.msra.mxu0 0.0
    %1313 = vmatprep.subr.mxu0 0.0
    %1314 = vmatpush1.msra.mxu0 0.0
    %1315 = vmatprep.subr.mxu0 0.0
    %1316 = vmatpush1.msra.mxu0 0.0
    %1317 = vmatprep.subr.mxu0 0.0
    %1318 = vmatpush1.msra.mxu0 0.0
    %1319 = vmatprep.subr.mxu0 0.0
    %1320 = vmatpush1.msra.mxu0 0.0
    %1321 = vmatprep.subr.mxu0 0.0
    %1322 = vmatpush1.msra.mxu0 0.0
    %1323 = vmatprep.subr.mxu0 0.0
    %1324 = vmatpush1.msra.mxu0 0.0
    %1325 = vmatprep.subr.mxu0 0.0
    %1326 = vmatpush1.msra.mxu0 0.0
    %1327 = vmatprep.subr.mxu0 0.0
    %1328 = vmatpush1.msra.mxu0 0.0
    %1329 = vmatprep.subr.mxu0 0.0
    %1330 = vmatpush1.msra.mxu0 0.0
    %1331 = vmatprep.subr.mxu0 0.0
    %1332 = vmatpush1.msra.mxu0 %v1293
    %1333 = vmatprep.subr.mxu0 0.0
    %1334 = vmatpush1.msra.mxu0 %v1292
    %1335 = vmatprep.subr.mxu0 0.0
    %1336 = vmatpush1.msra.mxu0 %v1291
    %1337 = vmatprep.subr.mxu0 0.0
    %1338 = vmatpush1.msra.mxu0 %v1290
    %1339 = vmatprep.subr.mxu0 0.0
    %1340 = vmatpush2.msra.mxu0 0.0
    %1341 = vmatprep.subr.mxu0 0.0
    %1342 = vmatpush2.msra.mxu0 0.0
    %1343 = vmatprep.subr.mxu0 0.0
    %1344 = vmatpush2.msra.mxu0 0.0
    %1345 = vmatprep.subr.mxu0 0.0
    %1346 = vmatpush2.msra.mxu0 0.0
    %1347 = vmatprep.subr.mxu0 0.0
    %1348 = vmatpush2.msra.mxu0 0.0
    %1349 = vmatprep.subr.mxu0 0.0
    %1350 = vmatpush2.msra.mxu0 0.0
    %1351 = vmatprep.subr.mxu0 0.0
    %1352 = vmatpush2.msra.mxu0 0.0
    %1353 = vmatprep.subr.mxu0 0.0
    %1354 = vmatpush2.msra.mxu0 0.0
    %1355 = vmatprep.subr.mxu0 0.0
    %1356 = vmatpush2.msra.mxu0 0.0
    %1357 = vmatprep.subr.mxu0 0.0
    %1358 = vmatpush2.msra.mxu0 0.0
    %1359 = vmatprep.subr.mxu0 0.0
    %1360 = vmatpush2.msra.mxu0 0.0
    %1361 = vmatprep.subr.mxu0 0.0
    %1362 = vmatpush2.msra.mxu0 0.0
    %1363 = vmatprep.subr.mxu0 0.0
    %1364 = vmatpush2.msra.mxu0 0.0
    %1365 = vmatprep.subr.mxu0 0.0
    %1366 = vmatpush2.msra.mxu0 0.0
    %1367 = vmatprep.subr.mxu0 0.0
    %1368 = vmatpush2.msra.mxu0 0.0
    %1369 = vmatprep.subr.mxu0 0.0
    %1370 = vmatpush2.msra.mxu0 0.0
    %1371 = vmatprep.mubr.f32.mxu0 0.0
    %1372 = vmatmul.mubr.f32.gmra.mxu0 %v1302
    %v1373 = vpop.f32.mrf.mxu0
    %v1374 = vadd.f32 %v1299, %v1373
    %v1375 = vpop.f32.mrf.mxu0
    %1376 = vmatprep.mubr.f32.mxu0 0.0
    %1377 = vmatmul.mubr.f32.gmra.mxu0 %v1305
    %v1378 = vpop.f32.mrf.mxu0
    %v1379 = vadd.f32 %v1299, %v1378
    %v1380 = vpop.f32.mrf.mxu0
    %1381 = vdwg.mxu0
    %v1383 = vsel %vm223, %v1282, 0
    %v1386 = vsel %vm223, %v1287, 0
    %v1389 = vsel %vm223, %v1374, 0
    %v1392 = vsel %vm223, %v1379, 0
    %1394 = vmatprep.subr.mxu0 0.0
    %1395 = vmatpush1.xpose.msra.mxu0 0.0
    %1396 = vmatprep.subr.mxu0 0.0
    %1397 = vmatpush1.xpose.msra.mxu0 0.0
    %1398 = vmatprep.subr.mxu0 0.0
    %1399 = vmatpush1.xpose.msra.mxu0 0.0
    %1400 = vmatprep.subr.mxu0 0.0
    %1401 = vmatpush1.xpose.msra.mxu0 0.0
    %1402 = vmatprep.subr.mxu0 0.0
    %1403 = vmatpush1.xpose.msra.mxu0 0.0
    %1404 = vmatprep.subr.mxu0 0.0
    %1405 = vmatpush1.xpose.msra.mxu0 0.0
    %1406 = vmatprep.subr.mxu0 0.0
    %1407 = vmatpush1.xpose.msra.mxu0 0.0
    %1408 = vmatprep.subr.mxu0 0.0
    %1409 = vmatpush1.xpose.msra.mxu0 0.0
    %1410 = vmatprep.subr.mxu0 0.0
    %1411 = vmatpush1.xpose.msra.mxu0 0.0
    %1412 = vmatprep.subr.mxu0 0.0
    %1413 = vmatpush1.xpose.msra.mxu0 0.0
    %1414 = vmatprep.subr.mxu0 0.0
    %1415 = vmatpush1.xpose.msra.mxu0 0.0
    %1416 = vmatprep.subr.mxu0 0.0
    %1417 = vmatpush1.xpose.msra.mxu0 0.0
    %1418 = vmatprep.subr.mxu0 0.0
    %1419 = vmatpush1.xpose.msra.mxu0 0.0
    %1420 = vmatprep.subr.mxu0 0.0
    %1421 = vmatpush1.xpose.msra.mxu0 0.0
    %1422 = vmatprep.subr.mxu0 0.0
    %1423 = vmatpush1.xpose.msra.mxu0 %v1392
    %1424 = vmatprep.subr.mxu0 0.0
    %1425 = vmatpush1.xpose.msra.mxu0 %v1389
    %1426 = vmatprep.subr.mxu0 0.0
    %1427 = vmatpush2.xpose.msra.mxu0 0.0
    %1428 = vmatprep.subr.mxu0 0.0
    %1429 = vmatpush2.xpose.msra.mxu0 0.0
    %1430 = vmatprep.subr.mxu0 0.0
    %1431 = vmatpush2.xpose.msra.mxu0 0.0
    %1432 = vmatprep.subr.mxu0 0.0
    %1433 = vmatpush2.xpose.msra.mxu0 0.0
    %1434 = vmatprep.subr.mxu0 0.0
    %1435 = vmatpush2.xpose.msra.mxu0 0.0
    %1436 = vmatprep.subr.mxu0 0.0
    %1437 = vmatpush2.xpose.msra.mxu0 0.0
    %1438 = vmatprep.subr.mxu0 0.0
    %1439 = vmatpush2.xpose.msra.mxu0 0.0
    %1440 = vmatprep.subr.mxu0 0.0
    %1441 = vmatpush2.xpose.msra.mxu0 0.0
    %1442 = vmatprep.subr.mxu0 0.0
    %1443 = vmatpush2.xpose.msra.mxu0 0.0
    %1444 = vmatprep.subr.mxu0 0.0
    %1445 = vmatpush2.xpose.msra.mxu0 0.0
    %1446 = vmatprep.subr.mxu0 0.0
    %1447 = vmatpush2.xpose.msra.mxu0 0.0
    %1448 = vmatprep.subr.mxu0 0.0
    %1449 = vmatpush2.xpose.msra.mxu0 0.0
    %1450 = vmatprep.subr.mxu0 0.0
    %1451 = vmatpush2.xpose.msra.mxu0 0.0
    %1452 = vmatprep.subr.mxu0 0.0
    %1453 = vmatpush2.xpose.msra.mxu0 0.0
    %1454 = vmatprep.subr.mxu0 0.0
    %1455 = vmatpush2.xpose.msra.mxu0 0.0
    %1456 = vmatprep.subr.mxu0 0.0
    %1457 = vmatpush2.xpose.msra.mxu0 0.0
    %1458 = vmatprep.mubr.f32.mxu0 0.0
    %1459 = vmatmul.mubr.f32.gmra.mxu0 %v1383
    %v1460 = vpop.f32.mrf.mxu0
    %v1461 = vadd.f32 %v70, %v1460
    %v1462 = vpop.f32.mrf.mxu0
    %1463 = vmatprep.mubr.f32.mxu0 0.0
    %1464 = vmatmul.mubr.f32.gmra.mxu0 %v1386
    %v1465 = vpop.f32.mrf.mxu0
    %v1466 = vadd.f32 %v71, %v1465
    %v1467 = vpop.f32.mrf.mxu0
    %1468 = vdwg.mxu0
    %v1469 = vsel %vm307, %v1461, -inf
    %1470 = vmax.xlane.f32.xlu0 %v1469
    %v1471 = vpop.xlane.xlu0 %1470
    %v1472 = vsel %vm307, %v1466, -inf
    %1473 = vmax.xlane.f32.xlu0 %v1472
    %v1474 = vpop.xlane.xlu0 %1473
    %v1475 = vsub.f32 %v1461, %v1471
    %v1476 = vsub.f32 %v1466, %v1474
    %v1477 = vmul.f32 %v1475, 1.442695
    %v1478 = vpow.pop %v1477
    %v1479 = vmul.f32 %v1476, 1.442695
    %v1480 = vpow.pop %v1479
    %v1481 = vsel %vm307, %v1478, 0.0
    %1482 = vadd.xlane.f32.xlu0 %v1481
    %v1483 = vpop.xlane.xlu0 %1482
    %v1484 = vsel %vm307, %v1480, 0.0
    %1485 = vadd.xlane.f32.xlu0 %v1484
    %v1486 = vpop.xlane.xlu0 %1485
    %v1487 = vrcp.pop %v1483
    %v1488 = vrcp.pop %v1486
    %v1489 = vmul.f32 %v1478, %v1487
    %v1490 = vmul.f32 %v1480, %v1488
    %1491 = vrot.lane.b32.xlu0 %v1374, 96
    %v1492 = vpop.permute.xlu0 %1491
    %1493 = vrot.lane.b32.xlu0 %v1379, 96
    %v1494 = vpop.permute.xlu0 %1493
    %v1498 = vsel %vm307, %v1489, 0
    %v1501 = vsel %vm307, %v1490, 0
    %1503 = vmatprep.subr.mxu0 0.0
    %1504 = vmatpush1.msra.mxu0 0.0
    %1505 = vmatprep.subr.mxu0 0.0
    %1506 = vmatpush1.msra.mxu0 0.0
    %1507 = vmatprep.subr.mxu0 0.0
    %1508 = vmatpush1.msra.mxu0 0.0
    %1509 = vmatprep.subr.mxu0 0.0
    %1510 = vmatpush1.msra.mxu0 0.0
    %1511 = vmatprep.subr.mxu0 0.0
    %1512 = vmatpush1.msra.mxu0 0.0
    %1513 = vmatprep.subr.mxu0 0.0
    %1514 = vmatpush1.msra.mxu0 0.0
    %1515 = vmatprep.subr.mxu0 0.0
    %1516 = vmatpush1.msra.mxu0 0.0
    %1517 = vmatprep.subr.mxu0 0.0
    %1518 = vmatpush1.msra.mxu0 0.0
    %1519 = vmatprep.subr.mxu0 0.0
    %1520 = vmatpush1.msra.mxu0 0.0
    %1521 = vmatprep.subr.mxu0 0.0
    %1522 = vmatpush1.msra.mxu0 0.0
    %1523 = vmatprep.subr.mxu0 0.0
    %1524 = vmatpush1.msra.mxu0 0.0
    %1525 = vmatprep.subr.mxu0 0.0
    %1526 = vmatpush1.msra.mxu0 0.0
    %1527 = vmatprep.subr.mxu0 0.0
    %1528 = vmatpush1.msra.mxu0 0.0
    %1529 = vmatprep.subr.mxu0 0.0
    %1530 = vmatpush1.msra.mxu0 0.0
    %1531 = vmatprep.subr.mxu0 0.0
    %1532 = vmatpush1.msra.mxu0 %v1494
    %1533 = vmatprep.subr.mxu0 0.0
    %1534 = vmatpush1.msra.mxu0 %v1492
    %1535 = vmatprep.subr.mxu0 0.0
    %1536 = vmatpush2.msra.mxu0 0.0
    %1537 = vmatprep.subr.mxu0 0.0
    %1538 = vmatpush2.msra.mxu0 0.0
    %1539 = vmatprep.subr.mxu0 0.0
    %1540 = vmatpush2.msra.mxu0 0.0
    %1541 = vmatprep.subr.mxu0 0.0
    %1542 = vmatpush2.msra.mxu0 0.0
    %1543 = vmatprep.subr.mxu0 0.0
    %1544 = vmatpush2.msra.mxu0 0.0
    %1545 = vmatprep.subr.mxu0 0.0
    %1546 = vmatpush2.msra.mxu0 0.0
    %1547 = vmatprep.subr.mxu0 0.0
    %1548 = vmatpush2.msra.mxu0 0.0
    %1549 = vmatprep.subr.mxu0 0.0
    %1550 = vmatpush2.msra.mxu0 0.0
    %1551 = vmatprep.subr.mxu0 0.0
    %1552 = vmatpush2.msra.mxu0 0.0
    %1553 = vmatprep.subr.mxu0 0.0
    %1554 = vmatpush2.msra.mxu0 0.0
    %1555 = vmatprep.subr.mxu0 0.0
    %1556 = vmatpush2.msra.mxu0 0.0
    %1557 = vmatprep.subr.mxu0 0.0
    %1558 = vmatpush2.msra.mxu0 0.0
    %1559 = vmatprep.subr.mxu0 0.0
    %1560 = vmatpush2.msra.mxu0 0.0
    %1561 = vmatprep.subr.mxu0 0.0
    %1562 = vmatpush2.msra.mxu0 0.0
    %1563 = vmatprep.subr.mxu0 0.0
    %1564 = vmatpush2.msra.mxu0 0.0
    %1565 = vmatprep.subr.mxu0 0.0
    %1566 = vmatpush2.msra.mxu0 0.0
    %1567 = vmatprep.mubr.f32.mxu0 0.0
    %1568 = vmatmul.mubr.f32.gmra.mxu0 %v1498
    %v1569 = vpop.f32.mrf.mxu0
    %v1570 = vadd.f32 0.0, %v1569
    %v1571 = vpop.f32.mrf.mxu0
    %1572 = vmatprep.mubr.f32.mxu0 0.0
    %1573 = vmatmul.mubr.f32.gmra.mxu0 %v1501
    %v1574 = vpop.f32.mrf.mxu0
    %v1575 = vadd.f32 0.0, %v1574
    %v1576 = vpop.f32.mrf.mxu0
    %1577 = vdwg.mxu0
    %1578 = vrot.lane.b32.xlu0 %v1282, 120
    %v1579 = vpop.permute.xlu0 %1578
    %1580 = vrot.lane.b32.xlu0 %v1287, 120
    %v1581 = vpop.permute.xlu0 %1580
    %1582 = vrot.lane.b32.xlu0 %v1374, 120
    %v1583 = vpop.permute.xlu0 %1582
    %1584 = vrot.lane.b32.xlu0 %v1379, 120
    %v1585 = vpop.permute.xlu0 %1584
    %v1586 = vsel %vm223, %v1579, 0
    %v1588 = vsel %vm223, %v1581, 0
    %v1590 = vsel %vm223, %v1583, 0
    %v1592 = vsel %vm223, %v1585, 0
    %1594 = vmatprep.subr.mxu0 0.0
    %1595 = vmatpush1.xpose.msra.mxu0 0.0
    %1596 = vmatprep.subr.mxu0 0.0
    %1597 = vmatpush1.xpose.msra.mxu0 0.0
    %1598 = vmatprep.subr.mxu0 0.0
    %1599 = vmatpush1.xpose.msra.mxu0 0.0
    %1600 = vmatprep.subr.mxu0 0.0
    %1601 = vmatpush1.xpose.msra.mxu0 0.0
    %1602 = vmatprep.subr.mxu0 0.0
    %1603 = vmatpush1.xpose.msra.mxu0 0.0
    %1604 = vmatprep.subr.mxu0 0.0
    %1605 = vmatpush1.xpose.msra.mxu0 0.0
    %1606 = vmatprep.subr.mxu0 0.0
    %1607 = vmatpush1.xpose.msra.mxu0 0.0
    %1608 = vmatprep.subr.mxu0 0.0
    %1609 = vmatpush1.xpose.msra.mxu0 0.0
    %1610 = vmatprep.subr.mxu0 0.0
    %1611 = vmatpush1.xpose.msra.mxu0 0.0
    %1612 = vmatprep.subr.mxu0 0.0
    %1613 = vmatpush1.xpose.msra.mxu0 0.0
    %1614 = vmatprep.subr.mxu0 0.0
    %1615 = vmatpush1.xpose.msra.mxu0 0.0
    %1616 = vmatprep.subr.mxu0 0.0
    %1617 = vmatpush1.xpose.msra.mxu0 0.0
    %1618 = vmatprep.subr.mxu0 0.0
    %1619 = vmatpush1.xpose.msra.mxu0 0.0
    %1620 = vmatprep.subr.mxu0 0.0
    %1621 = vmatpush1.xpose.msra.mxu0 0.0
    %1622 = vmatprep.subr.mxu0 0.0
    %1623 = vmatpush1.xpose.msra.mxu0 %v1592
    %1624 = vmatprep.subr.mxu0 0.0
    %1625 = vmatpush1.xpose.msra.mxu0 %v1590
    %1626 = vmatprep.subr.mxu0 0.0
    %1627 = vmatpush2.xpose.msra.mxu0 0.0
    %1628 = vmatprep.subr.mxu0 0.0
    %1629 = vmatpush2.xpose.msra.mxu0 0.0
    %1630 = vmatprep.subr.mxu0 0.0
    %1631 = vmatpush2.xpose.msra.mxu0 0.0
    %1632 = vmatprep.subr.mxu0 0.0
    %1633 = vmatpush2.xpose.msra.mxu0 0.0
    %1634 = vmatprep.subr.mxu0 0.0
    %1635 = vmatpush2.xpose.msra.mxu0 0.0
    %1636 = vmatprep.subr.mxu0 0.0
    %1637 = vmatpush2.xpose.msra.mxu0 0.0
    %1638 = vmatprep.subr.mxu0 0.0
    %1639 = vmatpush2.xpose.msra.mxu0 0.0
    %1640 = vmatprep.subr.mxu0 0.0
    %1641 = vmatpush2.xpose.msra.mxu0 0.0
    %1642 = vmatprep.subr.mxu0 0.0
    %1643 = vmatpush2.xpose.msra.mxu0 0.0
    %1644 = vmatprep.subr.mxu0 0.0
    %1645 = vmatpush2.xpose.msra.mxu0 0.0
    %1646 = vmatprep.subr.mxu0 0.0
    %1647 = vmatpush2.xpose.msra.mxu0 0.0
    %1648 = vmatprep.subr.mxu0 0.0
    %1649 = vmatpush2.xpose.msra.mxu0 0.0
    %1650 = vmatprep.subr.mxu0 0.0
    %1651 = vmatpush2.xpose.msra.mxu0 0.0
    %1652 = vmatprep.subr.mxu0 0.0
    %1653 = vmatpush2.xpose.msra.mxu0 0.0
    %1654 = vmatprep.subr.mxu0 0.0
    %1655 = vmatpush2.xpose.msra.mxu0 0.0
    %1656 = vmatprep.subr.mxu0 0.0
    %1657 = vmatpush2.xpose.msra.mxu0 0.0
    %1658 = vmatprep.mubr.f32.mxu0 0.0
    %1659 = vmatmul.mubr.f32.gmra.mxu0 %v1586
    %v1660 = vpop.f32.mrf.mxu0
    %v1661 = vadd.f32 %v70, %v1660
    %v1662 = vpop.f32.mrf.mxu0
    %1663 = vmatprep.mubr.f32.mxu0 0.0
    %1664 = vmatmul.mubr.f32.gmra.mxu0 %v1588
    %v1665 = vpop.f32.mrf.mxu0
    %v1666 = vadd.f32 %v71, %v1665
    %v1667 = vpop.f32.mrf.mxu0
    %1668 = vdwg.mxu0
    %v1669 = vsel %vm307, %v1661, -inf
    %1670 = vmax.xlane.f32.xlu0 %v1669
    %v1671 = vpop.xlane.xlu0 %1670
    %v1672 = vsel %vm307, %v1666, -inf
    %1673 = vmax.xlane.f32.xlu0 %v1672
    %v1674 = vpop.xlane.xlu0 %1673
    %v1675 = vsub.f32 %v1661, %v1671
    %v1676 = vsub.f32 %v1666, %v1674
    %v1677 = vmul.f32 %v1675, 1.442695
    %v1678 = vpow.pop %v1677
    %v1679 = vmul.f32 %v1676, 1.442695
    %v1680 = vpow.pop %v1679
    %v1681 = vsel %vm307, %v1678, 0.0
    %1682 = vadd.xlane.f32.xlu0 %v1681
    %v1683 = vpop.xlane.xlu0 %1682
    %v1684 = vsel %vm307, %v1680, 0.0
    %1685 = vadd.xlane.f32.xlu0 %v1684
    %v1686 = vpop.xlane.xlu0 %1685
    %v1687 = vrcp.pop %v1683
    %v1688 = vrcp.pop %v1686
    %v1689 = vmul.f32 %v1678, %v1687
    %v1690 = vmul.f32 %v1680, %v1688
    %1691 = vrot.lane.b32.xlu0 %v1374, 88
    %v1692 = vpop.permute.xlu0 %1691
    %1693 = vrot.lane.b32.xlu0 %v1379, 88
    %v1694 = vpop.permute.xlu0 %1693
    %v1698 = vsel %vm307, %v1689, 0
    %v1701 = vsel %vm307, %v1690, 0
    %1703 = vmatprep.subr.mxu0 0.0
    %1704 = vmatpush1.msra.mxu0 0.0
    %1705 = vmatprep.subr.mxu0 0.0
    %1706 = vmatpush1.msra.mxu0 0.0
    %1707 = vmatprep.subr.mxu0 0.0
    %1708 = vmatpush1.msra.mxu0 0.0
    %1709 = vmatprep.subr.mxu0 0.0
    %1710 = vmatpush1.msra.mxu0 0.0
    %1711 = vmatprep.subr.mxu0 0.0
    %1712 = vmatpush1.msra.mxu0 0.0
    %1713 = vmatprep.subr.mxu0 0.0
    %1714 = vmatpush1.msra.mxu0 0.0
    %1715 = vmatprep.subr.mxu0 0.0
    %1716 = vmatpush1.msra.mxu0 0.0
    %1717 = vmatprep.subr.mxu0 0.0
    %1718 = vmatpush1.msra.mxu0 0.0
    %1719 = vmatprep.subr.mxu0 0.0
    %1720 = vmatpush1.msra.mxu0 0.0
    %1721 = vmatprep.subr.mxu0 0.0
    %1722 = vmatpush1.msra.mxu0 0.0
    %1723 = vmatprep.subr.mxu0 0.0
    %1724 = vmatpush1.msra.mxu0 0.0
    %1725 = vmatprep.subr.mxu0 0.0
    %1726 = vmatpush1.msra.mxu0 0.0
    %1727 = vmatprep.subr.mxu0 0.0
    %1728 = vmatpush1.msra.mxu0 0.0
    %1729 = vmatprep.subr.mxu0 0.0
    %1730 = vmatpush1.msra.mxu0 0.0
    %1731 = vmatprep.subr.mxu0 0.0
    %1732 = vmatpush1.msra.mxu0 %v1694
    %1733 = vmatprep.subr.mxu0 0.0
    %1734 = vmatpush1.msra.mxu0 %v1692
    %1735 = vmatprep.subr.mxu0 0.0
    %1736 = vmatpush2.msra.mxu0 0.0
    %1737 = vmatprep.subr.mxu0 0.0
    %1738 = vmatpush2.msra.mxu0 0.0
    %1739 = vmatprep.subr.mxu0 0.0
    %1740 = vmatpush2.msra.mxu0 0.0
    %1741 = vmatprep.subr.mxu0 0.0
    %1742 = vmatpush2.msra.mxu0 0.0
    %1743 = vmatprep.subr.mxu0 0.0
    %1744 = vmatpush2.msra.mxu0 0.0
    %1745 = vmatprep.subr.mxu0 0.0
    %1746 = vmatpush2.msra.mxu0 0.0
    %1747 = vmatprep.subr.mxu0 0.0
    %1748 = vmatpush2.msra.mxu0 0.0
    %1749 = vmatprep.subr.mxu0 0.0
    %1750 = vmatpush2.msra.mxu0 0.0
    %1751 = vmatprep.subr.mxu0 0.0
    %1752 = vmatpush2.msra.mxu0 0.0
    %1753 = vmatprep.subr.mxu0 0.0
    %1754 = vmatpush2.msra.mxu0 0.0
    %1755 = vmatprep.subr.mxu0 0.0
    %1756 = vmatpush2.msra.mxu0 0.0
    %1757 = vmatprep.subr.mxu0 0.0
    %1758 = vmatpush2.msra.mxu0 0.0
    %1759 = vmatprep.subr.mxu0 0.0
    %1760 = vmatpush2.msra.mxu0 0.0
    %1761 = vmatprep.subr.mxu0 0.0
    %1762 = vmatpush2.msra.mxu0 0.0
    %1763 = vmatprep.subr.mxu0 0.0
    %1764 = vmatpush2.msra.mxu0 0.0
    %1765 = vmatprep.subr.mxu0 0.0
    %1766 = vmatpush2.msra.mxu0 0.0
    %1767 = vmatprep.mubr.f32.mxu0 0.0
    %1768 = vmatmul.mubr.f32.gmra.mxu0 %v1698
    %v1769 = vpop.f32.mrf.mxu0
    %v1770 = vadd.f32 0.0, %v1769
    %v1771 = vpop.f32.mrf.mxu0
    %1772 = vmatprep.mubr.f32.mxu0 0.0
    %1773 = vmatmul.mubr.f32.gmra.mxu0 %v1701
    %v1774 = vpop.f32.mrf.mxu0
    %v1775 = vadd.f32 0.0, %v1774
    %v1776 = vpop.f32.mrf.mxu0
    %1777 = vdwg.mxu0
    %1778 = vrot.lane.b32.xlu0 %v1282, 112
    %v1779 = vpop.permute.xlu0 %1778
    %1780 = vrot.lane.b32.xlu0 %v1287, 112
    %v1781 = vpop.permute.xlu0 %1780
    %1782 = vrot.lane.b32.xlu0 %v1374, 112
    %v1783 = vpop.permute.xlu0 %1782
    %1784 = vrot.lane.b32.xlu0 %v1379, 112
    %v1785 = vpop.permute.xlu0 %1784
    %v1786 = vsel %vm223, %v1779, 0
    %v1788 = vsel %vm223, %v1781, 0
    %v1790 = vsel %vm223, %v1783, 0
    %v1792 = vsel %vm223, %v1785, 0
    %1794 = vmatprep.subr.mxu0 0.0
    %1795 = vmatpush1.xpose.msra.mxu0 0.0
    %1796 = vmatprep.subr.mxu0 0.0
    %1797 = vmatpush1.xpose.msra.mxu0 0.0
    %1798 = vmatprep.subr.mxu0 0.0
    %1799 = vmatpush1.xpose.msra.mxu0 0.0
    %1800 = vmatprep.subr.mxu0 0.0
    %1801 = vmatpush1.xpose.msra.mxu0 0.0
    %1802 = vmatprep.subr.mxu0 0.0
    %1803 = vmatpush1.xpose.msra.mxu0 0.0
    %1804 = vmatprep.subr.mxu0 0.0
    %1805 = vmatpush1.xpose.msra.mxu0 0.0
    %1806 = vmatprep.subr.mxu0 0.0
    %1807 = vmatpush1.xpose.msra.mxu0 0.0
    %1808 = vmatprep.subr.mxu0 0.0
    %1809 = vmatpush1.xpose.msra.mxu0 0.0
    %1810 = vmatprep.subr.mxu0 0.0
    %1811 = vmatpush1.xpose.msra.mxu0 0.0
    %1812 = vmatprep.subr.mxu0 0.0
    %1813 = vmatpush1.xpose.msra.mxu0 0.0
    %1814 = vmatprep.subr.mxu0 0.0
    %1815 = vmatpush1.xpose.msra.mxu0 0.0
    %1816 = vmatprep.subr.mxu0 0.0
    %1817 = vmatpush1.xpose.msra.mxu0 0.0
    %1818 = vmatprep.subr.mxu0 0.0
    %1819 = vmatpush1.xpose.msra.mxu0 0.0
    %1820 = vmatprep.subr.mxu0 0.0
    %1821 = vmatpush1.xpose.msra.mxu0 0.0
    %1822 = vmatprep.subr.mxu0 0.0
    %1823 = vmatpush1.xpose.msra.mxu0 %v1792
    %1824 = vmatprep.subr.mxu0 0.0
    %1825 = vmatpush1.xpose.msra.mxu0 %v1790
    %1826 = vmatprep.subr.mxu0 0.0
    %1827 = vmatpush2.xpose.msra.mxu0 0.0
    %1828 = vmatprep.subr.mxu0 0.0
    %1829 = vmatpush2.xpose.msra.mxu0 0.0
    %1830 = vmatprep.subr.mxu0 0.0
    %1831 = vmatpush2.xpose.msra.mxu0 0.0
    %1832 = vmatprep.subr.mxu0 0.0
    %1833 = vmatpush2.xpose.msra.mxu0 0.0
    %1834 = vmatprep.subr.mxu0 0.0
    %1835 = vmatpush2.xpose.msra.mxu0 0.0
    %1836 = vmatprep.subr.mxu0 0.0
    %1837 = vmatpush2.xpose.msra.mxu0 0.0
    %1838 = vmatprep.subr.mxu0 0.0
    %1839 = vmatpush2.xpose.msra.mxu0 0.0
    %1840 = vmatprep.subr.mxu0 0.0
    %1841 = vmatpush2.xpose.msra.mxu0 0.0
    %1842 = vmatprep.subr.mxu0 0.0
    %1843 = vmatpush2.xpose.msra.mxu0 0.0
    %1844 = vmatprep.subr.mxu0 0.0
    %1845 = vmatpush2.xpose.msra.mxu0 0.0
    %1846 = vmatprep.subr.mxu0 0.0
    %1847 = vmatpush2.xpose.msra.mxu0 0.0
    %1848 = vmatprep.subr.mxu0 0.0
    %1849 = vmatpush2.xpose.msra.mxu0 0.0
    %1850 = vmatprep.subr.mxu0 0.0
    %1851 = vmatpush2.xpose.msra.mxu0 0.0
    %1852 = vmatprep.subr.mxu0 0.0
    %1853 = vmatpush2.xpose.msra.mxu0 0.0
    %1854 = vmatprep.subr.mxu0 0.0
    %1855 = vmatpush2.xpose.msra.mxu0 0.0
    %1856 = vmatprep.subr.mxu0 0.0
    %1857 = vmatpush2.xpose.msra.mxu0 0.0
    %1858 = vmatprep.mubr.f32.mxu0 0.0
    %1859 = vmatmul.mubr.f32.gmra.mxu0 %v1786
    %v1860 = vpop.f32.mrf.mxu0
    %v1861 = vadd.f32 %v70, %v1860
    %v1862 = vpop.f32.mrf.mxu0
    %1863 = vmatprep.mubr.f32.mxu0 0.0
    %1864 = vmatmul.mubr.f32.gmra.mxu0 %v1788
    %v1865 = vpop.f32.mrf.mxu0
    %v1866 = vadd.f32 %v71, %v1865
    %v1867 = vpop.f32.mrf.mxu0
    %1868 = vdwg.mxu0
    %v1869 = vsel %vm307, %v1861, -inf
    %1870 = vmax.xlane.f32.xlu0 %v1869
    %v1871 = vpop.xlane.xlu0 %1870
    %v1872 = vsel %vm307, %v1866, -inf
    %1873 = vmax.xlane.f32.xlu0 %v1872
    %v1874 = vpop.xlane.xlu0 %1873
    %v1875 = vsub.f32 %v1861, %v1871
    %v1876 = vsub.f32 %v1866, %v1874
    %v1877 = vmul.f32 %v1875, 1.442695
    %v1878 = vpow.pop %v1877
    %v1879 = vmul.f32 %v1876, 1.442695
    %v1880 = vpow.pop %v1879
    %v1881 = vsel %vm307, %v1878, 0.0
    %1882 = vadd.xlane.f32.xlu0 %v1881
    %v1883 = vpop.xlane.xlu0 %1882
    %v1884 = vsel %vm307, %v1880, 0.0
    %1885 = vadd.xlane.f32.xlu0 %v1884
    %v1886 = vpop.xlane.xlu0 %1885
    %v1887 = vrcp.pop %v1883
    %v1888 = vrcp.pop %v1886
    %v1889 = vmul.f32 %v1878, %v1887
    %v1890 = vmul.f32 %v1880, %v1888
    %1891 = vrot.lane.b32.xlu0 %v1374, 80
    %v1892 = vpop.permute.xlu0 %1891
    %1893 = vrot.lane.b32.xlu0 %v1379, 80
    %v1894 = vpop.permute.xlu0 %1893
    %v1898 = vsel %vm307, %v1889, 0
    %v1901 = vsel %vm307, %v1890, 0
    %1903 = vmatprep.subr.mxu0 0.0
    %1904 = vmatpush1.msra.mxu0 0.0
    %1905 = vmatprep.subr.mxu0 0.0
    %1906 = vmatpush1.msra.mxu0 0.0
    %1907 = vmatprep.subr.mxu0 0.0
    %1908 = vmatpush1.msra.mxu0 0.0
    %1909 = vmatprep.subr.mxu0 0.0
    %1910 = vmatpush1.msra.mxu0 0.0
    %1911 = vmatprep.subr.mxu0 0.0
    %1912 = vmatpush1.msra.mxu0 0.0
    %1913 = vmatprep.subr.mxu0 0.0
    %1914 = vmatpush1.msra.mxu0 0.0
    %1915 = vmatprep.subr.mxu0 0.0
    %1916 = vmatpush1.msra.mxu0 0.0
    %1917 = vmatprep.subr.mxu0 0.0
    %1918 = vmatpush1.msra.mxu0 0.0
    %1919 = vmatprep.subr.mxu0 0.0
    %1920 = vmatpush1.msra.mxu0 0.0
    %1921 = vmatprep.subr.mxu0 0.0
    %1922 = vmatpush1.msra.mxu0 0.0
    %1923 = vmatprep.subr.mxu0 0.0
    %1924 = vmatpush1.msra.mxu0 0.0
    %1925 = vmatprep.subr.mxu0 0.0
    %1926 = vmatpush1.msra.mxu0 0.0
    %1927 = vmatprep.subr.mxu0 0.0
    %1928 = vmatpush1.msra.mxu0 0.0
    %1929 = vmatprep.subr.mxu0 0.0
    %1930 = vmatpush1.msra.mxu0 0.0
    %1931 = vmatprep.subr.mxu0 0.0
    %1932 = vmatpush1.msra.mxu0 %v1894
    %1933 = vmatprep.subr.mxu0 0.0
    %1934 = vmatpush1.msra.mxu0 %v1892
    %1935 = vmatprep.subr.mxu0 0.0
    %1936 = vmatpush2.msra.mxu0 0.0
    %1937 = vmatprep.subr.mxu0 0.0
    %1938 = vmatpush2.msra.mxu0 0.0
    %1939 = vmatprep.subr.mxu0 0.0
    %1940 = vmatpush2.msra.mxu0 0.0
    %1941 = vmatprep.subr.mxu0 0.0
    %1942 = vmatpush2.msra.mxu0 0.0
    %1943 = vmatprep.subr.mxu0 0.0
    %1944 = vmatpush2.msra.mxu0 0.0
    %1945 = vmatprep.subr.mxu0 0.0
    %1946 = vmatpush2.msra.mxu0 0.0
    %1947 = vmatprep.subr.mxu0 0.0
    %1948 = vmatpush2.msra.mxu0 0.0
    %1949 = vmatprep.subr.mxu0 0.0
    %1950 = vmatpush2.msra.mxu0 0.0
    %1951 = vmatprep.subr.mxu0 0.0
    %1952 = vmatpush2.msra.mxu0 0.0
    %1953 = vmatprep.subr.mxu0 0.0
    %1954 = vmatpush2.msra.mxu0 0.0
    %1955 = vmatprep.subr.mxu0 0.0
    %1956 = vmatpush2.msra.mxu0 0.0
    %1957 = vmatprep.subr.mxu0 0.0
    %1958 = vmatpush2.msra.mxu0 0.0
    %1959 = vmatprep.subr.mxu0 0.0
    %1960 = vmatpush2.msra.mxu0 0.0
    %1961 = vmatprep.subr.mxu0 0.0
    %1962 = vmatpush2.msra.mxu0 0.0
    %1963 = vmatprep.subr.mxu0 0.0
    %1964 = vmatpush2.msra.mxu0 0.0
    %1965 = vmatprep.subr.mxu0 0.0
    %1966 = vmatpush2.msra.mxu0 0.0
    %1967 = vmatprep.mubr.f32.mxu0 0.0
    %1968 = vmatmul.mubr.f32.gmra.mxu0 %v1898
    %v1969 = vpop.f32.mrf.mxu0
    %v1970 = vadd.f32 0.0, %v1969
    %v1971 = vpop.f32.mrf.mxu0
    %1972 = vmatprep.mubr.f32.mxu0 0.0
    %1973 = vmatmul.mubr.f32.gmra.mxu0 %v1901
    %v1974 = vpop.f32.mrf.mxu0
    %v1975 = vadd.f32 0.0, %v1974
    %v1976 = vpop.f32.mrf.mxu0
    %1977 = vdwg.mxu0
    %1978 = vrot.lane.b32.xlu0 %v1282, 104
    %v1979 = vpop.permute.xlu0 %1978
    %1980 = vrot.lane.b32.xlu0 %v1287, 104
    %v1981 = vpop.permute.xlu0 %1980
    %1982 = vrot.lane.b32.xlu0 %v1374, 104
    %v1983 = vpop.permute.xlu0 %1982
    %1984 = vrot.lane.b32.xlu0 %v1379, 104
    %v1985 = vpop.permute.xlu0 %1984
    %v1986 = vsel %vm223, %v1979, 0
    %v1988 = vsel %vm223, %v1981, 0
    %v1990 = vsel %vm223, %v1983, 0
    %v1992 = vsel %vm223, %v1985, 0
    %1994 = vmatprep.subr.mxu0 0.0
    %1995 = vmatpush1.xpose.msra.mxu0 0.0
    %1996 = vmatprep.subr.mxu0 0.0
    %1997 = vmatpush1.xpose.msra.mxu0 0.0
    %1998 = vmatprep.subr.mxu0 0.0
    %1999 = vmatpush1.xpose.msra.mxu0 0.0
    %2000 = vmatprep.subr.mxu0 0.0
    %2001 = vmatpush1.xpose.msra.mxu0 0.0
    %2002 = vmatprep.subr.mxu0 0.0
    %2003 = vmatpush1.xpose.msra.mxu0 0.0
    %2004 = vmatprep.subr.mxu0 0.0
    %2005 = vmatpush1.xpose.msra.mxu0 0.0
    %2006 = vmatprep.subr.mxu0 0.0
    %2007 = vmatpush1.xpose.msra.mxu0 0.0
    %2008 = vmatprep.subr.mxu0 0.0
    %2009 = vmatpush1.xpose.msra.mxu0 0.0
    %2010 = vmatprep.subr.mxu0 0.0
    %2011 = vmatpush1.xpose.msra.mxu0 0.0
    %2012 = vmatprep.subr.mxu0 0.0
    %2013 = vmatpush1.xpose.msra.mxu0 0.0
    %2014 = vmatprep.subr.mxu0 0.0
    %2015 = vmatpush1.xpose.msra.mxu0 0.0
    %2016 = vmatprep.subr.mxu0 0.0
    %2017 = vmatpush1.xpose.msra.mxu0 0.0
    %2018 = vmatprep.subr.mxu0 0.0
    %2019 = vmatpush1.xpose.msra.mxu0 0.0
    %2020 = vmatprep.subr.mxu0 0.0
    %2021 = vmatpush1.xpose.msra.mxu0 0.0
    %2022 = vmatprep.subr.mxu0 0.0
    %2023 = vmatpush1.xpose.msra.mxu0 %v1992
    %2024 = vmatprep.subr.mxu0 0.0
    %2025 = vmatpush1.xpose.msra.mxu0 %v1990
    %2026 = vmatprep.subr.mxu0 0.0
    %2027 = vmatpush2.xpose.msra.mxu0 0.0
    %2028 = vmatprep.subr.mxu0 0.0
    %2029 = vmatpush2.xpose.msra.mxu0 0.0
    %2030 = vmatprep.subr.mxu0 0.0
    %2031 = vmatpush2.xpose.msra.mxu0 0.0
    %2032 = vmatprep.subr.mxu0 0.0
    %2033 = vmatpush2.xpose.msra.mxu0 0.0
    %2034 = vmatprep.subr.mxu0 0.0
    %2035 = vmatpush2.xpose.msra.mxu0 0.0
    %2036 = vmatprep.subr.mxu0 0.0
    %2037 = vmatpush2.xpose.msra.mxu0 0.0
    %2038 = vmatprep.subr.mxu0 0.0
    %2039 = vmatpush2.xpose.msra.mxu0 0.0
    %2040 = vmatprep.subr.mxu0 0.0
    %2041 = vmatpush2.xpose.msra.mxu0 0.0
    %2042 = vmatprep.subr.mxu0 0.0
    %2043 = vmatpush2.xpose.msra.mxu0 0.0
    %2044 = vmatprep.subr.mxu0 0.0
    %2045 = vmatpush2.xpose.msra.mxu0 0.0
    %2046 = vmatprep.subr.mxu0 0.0
    %2047 = vmatpush2.xpose.msra.mxu0 0.0
    %2048 = vmatprep.subr.mxu0 0.0
    %2049 = vmatpush2.xpose.msra.mxu0 0.0
    %2050 = vmatprep.subr.mxu0 0.0
    %2051 = vmatpush2.xpose.msra.mxu0 0.0
    %2052 = vmatprep.subr.mxu0 0.0
    %2053 = vmatpush2.xpose.msra.mxu0 0.0
    %2054 = vmatprep.subr.mxu0 0.0
    %2055 = vmatpush2.xpose.msra.mxu0 0.0
    %2056 = vmatprep.subr.mxu0 0.0
    %2057 = vmatpush2.xpose.msra.mxu0 0.0
    %2058 = vmatprep.mubr.f32.mxu0 0.0
    %2059 = vmatmul.mubr.f32.gmra.mxu0 %v1986
    %v2060 = vpop.f32.mrf.mxu0
    %v2061 = vadd.f32 %v70, %v2060
    %v2062 = vpop.f32.mrf.mxu0
    %2063 = vmatprep.mubr.f32.mxu0 0.0
    %2064 = vmatmul.mubr.f32.gmra.mxu0 %v1988
    %v2065 = vpop.f32.mrf.mxu0
    %v2066 = vadd.f32 %v71, %v2065
    %v2067 = vpop.f32.mrf.mxu0
    %2068 = vdwg.mxu0
    %v2069 = vsel %vm307, %v2061, -inf
    %2070 = vmax.xlane.f32.xlu0 %v2069
    %v2071 = vpop.xlane.xlu0 %2070
    %v2072 = vsel %vm307, %v2066, -inf
    %2073 = vmax.xlane.f32.xlu0 %v2072
    %v2074 = vpop.xlane.xlu0 %2073
    %v2075 = vsub.f32 %v2061, %v2071
    %v2076 = vsub.f32 %v2066, %v2074
    %v2077 = vmul.f32 %v2075, 1.442695
    %v2078 = vpow.pop %v2077
    %v2079 = vmul.f32 %v2076, 1.442695
    %v2080 = vpow.pop %v2079
    %v2081 = vsel %vm307, %v2078, 0.0
    %2082 = vadd.xlane.f32.xlu0 %v2081
    %v2083 = vpop.xlane.xlu0 %2082
    %v2084 = vsel %vm307, %v2080, 0.0
    %2085 = vadd.xlane.f32.xlu0 %v2084
    %v2086 = vpop.xlane.xlu0 %2085
    %v2087 = vrcp.pop %v2083
    %v2088 = vrcp.pop %v2086
    %v2089 = vmul.f32 %v2078, %v2087
    %v2090 = vmul.f32 %v2080, %v2088
    %2091 = vrot.lane.b32.xlu0 %v1374, 72
    %v2092 = vpop.permute.xlu0 %2091
    %2093 = vrot.lane.b32.xlu0 %v1379, 72
    %v2094 = vpop.permute.xlu0 %2093
    %v2098 = vsel %vm307, %v2089, 0
    %v2101 = vsel %vm307, %v2090, 0
    %2103 = vmatprep.subr.mxu0 0.0
    %2104 = vmatpush1.msra.mxu0 0.0
    %2105 = vmatprep.subr.mxu0 0.0
    %2106 = vmatpush1.msra.mxu0 0.0
    %2107 = vmatprep.subr.mxu0 0.0
    %2108 = vmatpush1.msra.mxu0 0.0
    %2109 = vmatprep.subr.mxu0 0.0
    %2110 = vmatpush1.msra.mxu0 0.0
    %2111 = vmatprep.subr.mxu0 0.0
    %2112 = vmatpush1.msra.mxu0 0.0
    %2113 = vmatprep.subr.mxu0 0.0
    %2114 = vmatpush1.msra.mxu0 0.0
    %2115 = vmatprep.subr.mxu0 0.0
    %2116 = vmatpush1.msra.mxu0 0.0
    %2117 = vmatprep.subr.mxu0 0.0
    %2118 = vmatpush1.msra.mxu0 0.0
    %2119 = vmatprep.subr.mxu0 0.0
    %2120 = vmatpush1.msra.mxu0 0.0
    %2121 = vmatprep.subr.mxu0 0.0
    %2122 = vmatpush1.msra.mxu0 0.0
    %2123 = vmatprep.subr.mxu0 0.0
    %2124 = vmatpush1.msra.mxu0 0.0
    %2125 = vmatprep.subr.mxu0 0.0
    %2126 = vmatpush1.msra.mxu0 0.0
    %2127 = vmatprep.subr.mxu0 0.0
    %2128 = vmatpush1.msra.mxu0 0.0
    %2129 = vmatprep.subr.mxu0 0.0
    %2130 = vmatpush1.msra.mxu0 0.0
    %2131 = vmatprep.subr.mxu0 0.0
    %2132 = vmatpush1.msra.mxu0 %v2094
    %2133 = vmatprep.subr.mxu0 0.0
    %2134 = vmatpush1.msra.mxu0 %v2092
    %2135 = vmatprep.subr.mxu0 0.0
    %2136 = vmatpush2.msra.mxu0 0.0
    %2137 = vmatprep.subr.mxu0 0.0
    %2138 = vmatpush2.msra.mxu0 0.0
    %2139 = vmatprep.subr.mxu0 0.0
    %2140 = vmatpush2.msra.mxu0 0.0
    %2141 = vmatprep.subr.mxu0 0.0
    %2142 = vmatpush2.msra.mxu0 0.0
    %2143 = vmatprep.subr.mxu0 0.0
    %2144 = vmatpush2.msra.mxu0 0.0
    %2145 = vmatprep.subr.mxu0 0.0
    %2146 = vmatpush2.msra.mxu0 0.0
    %2147 = vmatprep.subr.mxu0 0.0
    %2148 = vmatpush2.msra.mxu0 0.0
    %2149 = vmatprep.subr.mxu0 0.0
    %2150 = vmatpush2.msra.mxu0 0.0
    %2151 = vmatprep.subr.mxu0 0.0
    %2152 = vmatpush2.msra.mxu0 0.0
    %2153 = vmatprep.subr.mxu0 0.0
    %2154 = vmatpush2.msra.mxu0 0.0
    %2155 = vmatprep.subr.mxu0 0.0
    %2156 = vmatpush2.msra.mxu0 0.0
    %2157 = vmatprep.subr.mxu0 0.0
    %2158 = vmatpush2.msra.mxu0 0.0
    %2159 = vmatprep.subr.mxu0 0.0
    %2160 = vmatpush2.msra.mxu0 0.0
    %2161 = vmatprep.subr.mxu0 0.0
    %2162 = vmatpush2.msra.mxu0 0.0
    %2163 = vmatprep.subr.mxu0 0.0
    %2164 = vmatpush2.msra.mxu0 0.0
    %2165 = vmatprep.subr.mxu0 0.0
    %2166 = vmatpush2.msra.mxu0 0.0
    %2167 = vmatprep.mubr.f32.mxu0 0.0
    %2168 = vmatmul.mubr.f32.gmra.mxu0 %v2098
    %v2169 = vpop.f32.mrf.mxu0
    %v2170 = vadd.f32 0.0, %v2169
    %v2171 = vpop.f32.mrf.mxu0
    %2172 = vmatprep.mubr.f32.mxu0 0.0
    %2173 = vmatmul.mubr.f32.gmra.mxu0 %v2101
    %v2174 = vpop.f32.mrf.mxu0
    %v2175 = vadd.f32 0.0, %v2174
    %v2176 = vpop.f32.mrf.mxu0
    %2177 = vdwg.mxu0
    %2180 = vrot.lane.b32.xlu0 %v1770, 8
    %v2181 = vpop.permute.xlu0 %2180
    %2182 = vrot.lane.b32.xlu0 %v1775, 8
    %v2183 = vpop.permute.xlu0 %2182
    %2188 = vrot.lane.b32.xlu0 %v1970, 16
    %v2189 = vpop.permute.xlu0 %2188
    %2190 = vrot.lane.b32.xlu0 %v1975, 16
    %v2191 = vpop.permute.xlu0 %2190
    %2196 = vrot.lane.b32.xlu0 %v2170, 24
    %v2197 = vpop.permute.xlu0 %2196
    %2198 = vrot.lane.b32.xlu0 %v2175, 24
    %v2199 = vpop.permute.xlu0 %2198
    %v2202 = vsel %vm223, %v1570, %v2181
    %v2203 = vsel %vm223, %v1575, %v2183
    %v2204 = vsel %vm307, %v2202, %v2189
    %v2205 = vsel %vm307, %v2203, %v2191
    %v2206 = vsel %vm1045, %v2204, %v2197
    %v2207 = vsel %vm1045, %v2205, %v2199
    %s2208 = scalar_lea.vmem %s9, 64
    %v2209 = vld [vmem:[%s2208] sm:$0xff]
    %v2210 = vld [vmem:[%s2208 + $0x8] sm:$0xff]
    %v2211 = vld [vmem:[%s2208 + $0x10] sm:$0xff]
    %v2212 = vld [vmem:[%s2208 + $0x18] sm:$0xff]
    %v2214 = vsel %vm74, %v2206, 0
    %v2217 = vsel %vm74, %v2207, 0
    %2219 = vmatprep.subr.mxu0 0.0
    %2220 = vmatpush1.msra.mxu0 0.0
    %2221 = vmatprep.subr.mxu0 0.0
    %2222 = vmatpush1.msra.mxu0 0.0
    %2223 = vmatprep.subr.mxu0 0.0
    %2224 = vmatpush1.msra.mxu0 0.0
    %2225 = vmatprep.subr.mxu0 0.0
    %2226 = vmatpush1.msra.mxu0 0.0
    %2227 = vmatprep.subr.mxu0 0.0
    %2228 = vmatpush1.msra.mxu0 0.0
    %2229 = vmatprep.subr.mxu0 0.0
    %2230 = vmatpush1.msra.mxu0 0.0
    %2231 = vmatprep.subr.mxu0 0.0
    %2232 = vmatpush1.msra.mxu0 0.0
    %2233 = vmatprep.subr.mxu0 0.0
    %2234 = vmatpush1.msra.mxu0 0.0
    %2235 = vmatprep.subr.mxu0 0.0
    %2236 = vmatpush1.msra.mxu0 0.0
    %2237 = vmatprep.subr.mxu0 0.0
    %2238 = vmatpush1.msra.mxu0 0.0
    %2239 = vmatprep.subr.mxu0 0.0
    %2240 = vmatpush1.msra.mxu0 0.0
    %2241 = vmatprep.subr.mxu0 0.0
    %2242 = vmatpush1.msra.mxu0 0.0
    %2243 = vmatprep.subr.mxu0 0.0
    %2244 = vmatpush1.msra.mxu0 %v2212
    %2245 = vmatprep.subr.mxu0 0.0
    %2246 = vmatpush1.msra.mxu0 %v2211
    %2247 = vmatprep.subr.mxu0 0.0
    %2248 = vmatpush1.msra.mxu0 %v2210
    %2249 = vmatprep.subr.mxu0 0.0
    %2250 = vmatpush1.msra.mxu0 %v2209
    %2251 = vmatprep.subr.mxu0 0.0
    %2252 = vmatpush2.msra.mxu0 0.0
    %2253 = vmatprep.subr.mxu0 0.0
    %2254 = vmatpush2.msra.mxu0 0.0
    %2255 = vmatprep.subr.mxu0 0.0
    %2256 = vmatpush2.msra.mxu0 0.0
    %2257 = vmatprep.subr.mxu0 0.0
    %2258 = vmatpush2.msra.mxu0 0.0
    %2259 = vmatprep.subr.mxu0 0.0
    %2260 = vmatpush2.msra.mxu0 0.0
    %2261 = vmatprep.subr.mxu0 0.0
    %2262 = vmatpush2.msra.mxu0 0.0
    %2263 = vmatprep.subr.mxu0 0.0
    %2264 = vmatpush2.msra.mxu0 0.0
    %2265 = vmatprep.subr.mxu0 0.0
    %2266 = vmatpush2.msra.mxu0 0.0
    %2267 = vmatprep.subr.mxu0 0.0
    %2268 = vmatpush2.msra.mxu0 0.0
    %2269 = vmatprep.subr.mxu0 0.0
    %2270 = vmatpush2.msra.mxu0 0.0
    %2271 = vmatprep.subr.mxu0 0.0
    %2272 = vmatpush2.msra.mxu0 0.0
    %2273 = vmatprep.subr.mxu0 0.0
    %2274 = vmatpush2.msra.mxu0 0.0
    %2275 = vmatprep.subr.mxu0 0.0
    %2276 = vmatpush2.msra.mxu0 0.0
    %2277 = vmatprep.subr.mxu0 0.0
    %2278 = vmatpush2.msra.mxu0 0.0
    %2279 = vmatprep.subr.mxu0 0.0
    %2280 = vmatpush2.msra.mxu0 0.0
    %2281 = vmatprep.subr.mxu0 0.0
    %2282 = vmatpush2.msra.mxu0 0.0
    %2283 = vmatprep.mubr.f32.mxu0 0.0
    %2284 = vmatmul.mubr.f32.gmra.mxu0 %v2214
    %v2285 = vpop.f32.mrf.mxu0
    %v2286 = vadd.f32 0.0, %v2285
    %v2287 = vpop.f32.mrf.mxu0
    %2288 = vmatprep.mubr.f32.mxu0 0.0
    %2289 = vmatmul.mubr.f32.gmra.mxu0 %v2217
    %v2290 = vpop.f32.mrf.mxu0
    %v2291 = vadd.f32 0.0, %v2290
    %v2292 = vpop.f32.mrf.mxu0
    %2293 = vdwg.mxu0
    %v2294 = vadd.f32 %v1142, %v2286
    %v2295 = vadd.f32 %v1143, %v2291
    %s2296 = scalar_lea.vmem %s10, 2
    %v2297 = vld [vmem:[%s2296] sm:$0x1]
    %v2299 = vlaneseq
    %v2300 = vshrl.u32 %v2299, 7
    %v2301 = vsub.s32 0, %v2300
    %v2302 = vrot.slane %v2297, %v2301
    %v2304 = vadd.f32 %v2294, %v2302
    %v2305 = vadd.f32 %v2295, %v2302
    %s2306 = sld [smem:[#allocation2 + $0x4]]
    %s2307 = sld [smem:[#allocation2 + $0x5]]
    %v2308 = vsel %vm74, %v2304, 0.0
    %2309 = vadd.xlane.f32.xlu0 %v2308
    %v2310 = vpop.xlane.xlu0 %2309
    %v2311 = vsel %vm74, %v2305, 0.0
    %2312 = vadd.xlane.f32.xlu0 %v2311
    %v2313 = vpop.xlane.xlu0 %2312
    %v2314 = vmul.f32 %v2304, %v2304
    %v2315 = vmul.f32 %v2305, %v2305
    %v2316 = vsel %vm74, %v2314, 0.0
    %2317 = vadd.xlane.f32.xlu0 %v2316
    %v2318 = vpop.xlane.xlu0 %2317
    %v2319 = vsel %vm74, %v2315, 0.0
    %2320 = vadd.xlane.f32.xlu0 %v2319
    %v2321 = vpop.xlane.xlu0 %2320
    %v2322 = vmul.f32 %v2310, 0.03125
    %v2323 = vmul.f32 %v2313, 0.03125
    %v2324 = vmul.f32 %v2310, %v2322
    %v2325 = vmul.f32 %v2313, %v2323
    %v2326 = vsub.f32 %v2318, %v2324
    %v2327 = vsub.f32 %v2321, %v2325
    %v2328 = vmul.f32 %v2326, 0.032258064
    %v2329 = vmul.f32 %v2327, 0.032258064
    %v2330 = vrsqrt.pop %v2328
    %v2331 = vmul.f32 %v2328, %v2330
    %vm2332 = vcmp.eq.f32.partialorder %v2328, inf
    %v2333 = vsel %vm2332, %v2328, %v2331
    %vm2334 = vcmp.eq.f32.partialorder %v2328, 0.0
    %v2335 = vand.u32 %v2328, 2147483648
    %v2336 = vsel %vm2334, %v2335, %v2333
    %v2337 = vrsqrt.pop %v2329
    %v2338 = vmul.f32 %v2329, %v2337
    %vm2339 = vcmp.eq.f32.partialorder %v2329, inf
    %v2340 = vsel %vm2339, %v2329, %v2338
    %vm2341 = vcmp.eq.f32.partialorder %v2329, 0.0
    %v2342 = vand.u32 %v2329, 2147483648
    %v2343 = vsel %vm2341, %v2342, %v2340
    %v2344 = vadd.f32 %v2336, 1e-06
    %v2345 = vadd.f32 %v2343, 1e-06
    %v2346 = vrcp.pop %v2344
    %v2347 = vrcp.pop %v2345
    %v2348 = vsub.f32 %v2304, %v2322
    %v2349 = vsub.f32 %v2305, %v2323
    %v2350 = vstv %s2306
    %v2351 = vmul.f32 %v2350, %v2348
    %v2352 = vmul.f32 %v2350, %v2349
    %v2353 = vmul.f32 %v2351, %v2346
    %v2354 = vmul.f32 %v2352, %v2347
    %v2355 = vstv %s2307
    %v2356 = vadd.f32 %v2353, %v2355
    %v2357 = vadd.f32 %v2354, %v2355
    %v2358 = vld [vmem:[%s11] sm:$0xff]
    %v2359 = vld [vmem:[%s11 + $0x8] sm:$0xff]
    %v2360 = vld [vmem:[%s11 + $0x10] sm:$0xff]
    %v2361 = vld [vmem:[%s11 + $0x18] sm:$0xff]
    %v2362 = vld [vmem:[%s12] sm:$0x1]
    %v2364 = vlaneseq
    %v2365 = vshrl.u32 %v2364, 7
    %v2366 = vsub.s32 0, %v2365
    %v2367 = vrot.slane %v2362, %v2366
    %v2370 = vsel %vm74, %v2356, 0
    %v2373 = vsel %vm74, %v2357, 0
    %2375 = vmatprep.subr.mxu0 0.0
    %2376 = vmatpush1.msra.mxu0 0.0
    %2377 = vmatprep.subr.mxu0 0.0
    %2378 = vmatpush1.msra.mxu0 0.0
    %2379 = vmatprep.subr.mxu0 0.0
    %2380 = vmatpush1.msra.mxu0 0.0
    %2381 = vmatprep.subr.mxu0 0.0
    %2382 = vmatpush1.msra.mxu0 0.0
    %2383 = vmatprep.subr.mxu0 0.0
    %2384 = vmatpush1.msra.mxu0 0.0
    %2385 = vmatprep.subr.mxu0 0.0
    %2386 = vmatpush1.msra.mxu0 0.0
    %2387 = vmatprep.subr.mxu0 0.0
    %2388 = vmatpush1.msra.mxu0 0.0
    %2389 = vmatprep.subr.mxu0 0.0
    %2390 = vmatpush1.msra.mxu0 0.0
    %2391 = vmatprep.subr.mxu0 0.0
    %2392 = vmatpush1.msra.mxu0 0.0
    %2393 = vmatprep.subr.mxu0 0.0
    %2394 = vmatpush1.msra.mxu0 0.0
    %2395 = vmatprep.subr.mxu0 0.0
    %2396 = vmatpush1.msra.mxu0 0.0
    %2397 = vmatprep.subr.mxu0 0.0
    %2398 = vmatpush1.msra.mxu0 0.0
    %2399 = vmatprep.subr.mxu0 0.0
    %2400 = vmatpush1.msra.mxu0 %v2361
    %2401 = vmatprep.subr.mxu0 0.0
    %2402 = vmatpush1.msra.mxu0 %v2360
    %2403 = vmatprep.subr.mxu0 0.0
    %2404 = vmatpush1.msra.mxu0 %v2359
    %2405 = vmatprep.subr.mxu0 0.0
    %2406 = vmatpush1.msra.mxu0 %v2358
    %2407 = vmatprep.subr.mxu0 0.0
    %2408 = vmatpush2.msra.mxu0 0.0
    %2409 = vmatprep.subr.mxu0 0.0
    %2410 = vmatpush2.msra.mxu0 0.0
    %2411 = vmatprep.subr.mxu0 0.0
    %2412 = vmatpush2.msra.mxu0 0.0
    %2413 = vmatprep.subr.mxu0 0.0
    %2414 = vmatpush2.msra.mxu0 0.0
    %2415 = vmatprep.subr.mxu0 0.0
    %2416 = vmatpush2.msra.mxu0 0.0
    %2417 = vmatprep.subr.mxu0 0.0
    %2418 = vmatpush2.msra.mxu0 0.0
    %2419 = vmatprep.subr.mxu0 0.0
    %2420 = vmatpush2.msra.mxu0 0.0
    %2421 = vmatprep.subr.mxu0 0.0
    %2422 = vmatpush2.msra.mxu0 0.0
    %2423 = vmatprep.subr.mxu0 0.0
    %2424 = vmatpush2.msra.mxu0 0.0
    %2425 = vmatprep.subr.mxu0 0.0
    %2426 = vmatpush2.msra.mxu0 0.0
    %2427 = vmatprep.subr.mxu0 0.0
    %2428 = vmatpush2.msra.mxu0 0.0
    %2429 = vmatprep.subr.mxu0 0.0
    %2430 = vmatpush2.msra.mxu0 0.0
    %2431 = vmatprep.subr.mxu0 0.0
    %2432 = vmatpush2.msra.mxu0 0.0
    %2433 = vmatprep.subr.mxu0 0.0
    %2434 = vmatpush2.msra.mxu0 0.0
    %2435 = vmatprep.subr.mxu0 0.0
    %2436 = vmatpush2.msra.mxu0 0.0
    %2437 = vmatprep.subr.mxu0 0.0
    %2438 = vmatpush2.msra.mxu0 0.0
    %2439 = vmatprep.mubr.f32.mxu0 0.0
    %2440 = vmatmul.mubr.f32.gmra.mxu0 %v2370
    %v2441 = vpop.f32.mrf.mxu0
    %v2442 = vadd.f32 %v2367, %v2441
    %v2443 = vpop.f32.mrf.mxu0
    %2444 = vmatprep.mubr.f32.mxu0 0.0
    %2445 = vmatmul.mubr.f32.gmra.mxu0 %v2373
    %v2446 = vpop.f32.mrf.mxu0
    %v2447 = vadd.f32 %v2367, %v2446
    %v2448 = vpop.f32.mrf.mxu0
    %2449 = vdwg.mxu0
    %v2450 = vmax.f32 %v2442, 0.0
    %v2451 = vmax.f32 %v2447, 0.0
    %v2452 = vld [vmem:[%s13] sm:$0xff]
    %v2453 = vld [vmem:[%s13 + $0x8] sm:$0xff]
    %v2454 = vld [vmem:[%s13 + $0x10] sm:$0xff]
    %v2455 = vld [vmem:[%s13 + $0x18] sm:$0xff]
    %v2456 = vld [vmem:[%s13 + $0x20] sm:$0xff]
    %v2457 = vld [vmem:[%s13 + $0x28] sm:$0xff]
    %v2458 = vld [vmem:[%s13 + $0x30] sm:$0xff]
    %v2459 = vld [vmem:[%s13 + $0x38] sm:$0xff]
    %vm2460 = vcmask 523264
    %v2462 = vsel %vm2460, %v2450, 0
    %v2465 = vsel %vm2460, %v2451, 0
    %2467 = vmatprep.subr.mxu0 0.0
    %2468 = vmatpush1.msra.mxu0 0.0
    %2469 = vmatprep.subr.mxu0 0.0
    %2470 = vmatpush1.msra.mxu0 0.0
    %2471 = vmatprep.subr.mxu0 0.0
    %2472 = vmatpush1.msra.mxu0 0.0
    %2473 = vmatprep.subr.mxu0 0.0
    %2474 = vmatpush1.msra.mxu0 0.0
    %2475 = vmatprep.subr.mxu0 0.0
    %2476 = vmatpush1.msra.mxu0 0.0
    %2477 = vmatprep.subr.mxu0 0.0
    %2478 = vmatpush1.msra.mxu0 0.0
    %2479 = vmatprep.subr.mxu0 0.0
    %2480 = vmatpush1.msra.mxu0 0.0
    %2481 = vmatprep.subr.mxu0 0.0
    %2482 = vmatpush1.msra.mxu0 0.0
    %2483 = vmatprep.subr.mxu0 0.0
    %2484 = vmatpush1.msra.mxu0 %v2459
    %2485 = vmatprep.subr.mxu0 0.0
    %2486 = vmatpush1.msra.mxu0 %v2458
    %2487 = vmatprep.subr.mxu0 0.0
    %2488 = vmatpush1.msra.mxu0 %v2457
    %2489 = vmatprep.subr.mxu0 0.0
    %2490 = vmatpush1.msra.mxu0 %v2456
    %2491 = vmatprep.subr.mxu0 0.0
    %2492 = vmatpush1.msra.mxu0 %v2455
    %2493 = vmatprep.subr.mxu0 0.0
    %2494 = vmatpush1.msra.mxu0 %v2454
    %2495 = vmatprep.subr.mxu0 0.0
    %2496 = vmatpush1.msra.mxu0 %v2453
    %2497 = vmatprep.subr.mxu0 0.0
    %2498 = vmatpush1.msra.mxu0 %v2452
    %2499 = vmatprep.subr.mxu0 0.0
    %2500 = vmatpush2.msra.mxu0 0.0
    %2501 = vmatprep.subr.mxu0 0.0
    %2502 = vmatpush2.msra.mxu0 0.0
    %2503 = vmatprep.subr.mxu0 0.0
    %2504 = vmatpush2.msra.mxu0 0.0
    %2505 = vmatprep.subr.mxu0 0.0
    %2506 = vmatpush2.msra.mxu0 0.0
    %2507 = vmatprep.subr.mxu0 0.0
    %2508 = vmatpush2.msra.mxu0 0.0
    %2509 = vmatprep.subr.mxu0 0.0
    %2510 = vmatpush2.msra.mxu0 0.0
    %2511 = vmatprep.subr.mxu0 0.0
    %2512 = vmatpush2.msra.mxu0 0.0
    %2513 = vmatprep.subr.mxu0 0.0
    %2514 = vmatpush2.msra.mxu0 0.0
    %2515 = vmatprep.subr.mxu0 0.0
    %2516 = vmatpush2.msra.mxu0 0.0
    %2517 = vmatprep.subr.mxu0 0.0
    %2518 = vmatpush2.msra.mxu0 0.0
    %2519 = vmatprep.subr.mxu0 0.0
    %2520 = vmatpush2.msra.mxu0 0.0
    %2521 = vmatprep.subr.mxu0 0.0
    %2522 = vmatpush2.msra.mxu0 0.0
    %2523 = vmatprep.subr.mxu0 0.0
    %2524 = vmatpush2.msra.mxu0 0.0
    %2525 = vmatprep.subr.mxu0 0.0
    %2526 = vmatpush2.msra.mxu0 0.0
    %2527 = vmatprep.subr.mxu0 0.0
    %2528 = vmatpush2.msra.mxu0 0.0
    %2529 = vmatprep.subr.mxu0 0.0
    %2530 = vmatpush2.msra.mxu0 0.0
    %2531 = vmatprep.mubr.f32.mxu0 0.0
    %2532 = vmatmul.mubr.f32.gmra.mxu0 %v2462
    %v2533 = vpop.f32.mrf.mxu0
    %v2534 = vadd.f32 0.0, %v2533
    %v2535 = vpop.f32.mrf.mxu0
    %2536 = vmatprep.mubr.f32.mxu0 0.0
    %2537 = vmatmul.mubr.f32.gmra.mxu0 %v2465
    %v2538 = vpop.f32.mrf.mxu0
    %v2539 = vadd.f32 0.0, %v2538
    %v2540 = vpop.f32.mrf.mxu0
    %2541 = vdwg.mxu0
    %v2542 = vadd.f32 %v2304, %v2534
    %v2543 = vadd.f32 %v2305, %v2539
    %v2544 = vld [vmem:[%s14] sm:$0x1]
    %v2546 = vlaneseq
    %v2547 = vshrl.u32 %v2546, 7
    %v2548 = vsub.s32 0, %v2547
    %v2549 = vrot.slane %v2544, %v2548
    %v2551 = vadd.f32 %v2542, %v2549
    %v2552 = vadd.f32 %v2543, %v2549
    %2553 = vst.msk [vmem:[#allocation5] sm:$0xff] %vm74, %v2551
    %2554 = vst.msk [vmem:[#allocation5 + $0x8] sm:$0xff] %vm74, %v2552
    // Predicated region
    $region66: #{decoder_block.1} parent=1 // pred_check
      _
    $region67: #{decoder_block.1} parent=1 // pred_check_branch
      %2556 = sbr.rel (0) target = $region69
    $region68: #{decoder_block.1} parent=1 // pred_region
      %s2558 = ssub.s32 256, 256
      %2559 = vsyncadd [#allocation3], %s2558
      %s2560 = sshll.u32 [#allocation5], 4
      %s2561 = int_to_ptr.vmem [resolvable:$true] %s2560
      %2566 = dma.vmem_to_hbm [thread:$0]  %s2561, 256, %s15, [#allocation3], 128, 128, 8
    $region69: #{decoder_block.1} parent=1 // pred_fallthru
      _
    // Predicated region
    $region70: #{decoder_block.1} parent=1 // pred_check
      _
    $region71: #{decoder_block.1} parent=1 // pred_check_branch
      %2568 = sbr.rel (0) target = $region73
    $region72: #{decoder_block.1} parent=1 // pred_region
      %2569 = dma.done [#allocation3], 256
    $region73: #{decoder_block.1} parent=1 // pred_fallthru
      _
    %2570 = vsyncpa [#allocation3], 1
    %2571 = vsyncpa [#allocation4], 1

</llo_original>
